<compile_context>
chip_gen: v5e
topology: v5e:2x2
jax: 0.10.0
libtpu: 0.0.40
codegen_flags: <defaults>
</compile_context>

<pallas_src>
import functools

import jax
import jax.numpy as jnp
from jax.experimental import pallas as pl
from jax.experimental.pallas import tpu as pltpu

TILE_I = 128       # atoms i per grid step (rows); one (8,128)-aligned row tile
TILE_J_MAX = 1024  # neighbour-block width (columns of the pair matrix)
LANES = 128        # lane-dense output width (unmasked vst)
P_COLS = 16        # moment matrix width: [1 | R_j | R_j (x) R_j | 0 0 0]
_R2_MIN = 1e-6     # below this a pair is treated as the self-pair diagonal.
                   # NOTE: real pairs closer than 1e-3 length units are also
                   # masked (documented behavioural difference vs autograd).


def _lj_pair_kernel(r_col_ref, r_row_ref, p_ref, out_ref, acc_ref, *,
                    cutoff, epsilon, sigma):
    # r_col_ref: (TILE_I, 8)   rows = atoms i, cols 0..2 = x,y,z  (centred)
    # r_row_ref: (8, TILE_J)   rows 0..2 = x,y,z, lanes = atoms j (centred)
    # p_ref    : (TILE_J, 16)  col 0 = 1, 1-3 = R_j, 4-12 = R_j,a*R_j,b, 13-15 = 0
    # out_ref  : (TILE_I, 128) col 0 = local energy, 1-3 = forces,
    #                          4-12 = per-atom virial partials, 13.. = 0
    # acc_ref  : (TILE_I, 16)  running [S0 | S1 | S2 | 0.5*sum u | 0 0]
    j = pl.program_id(1)

    @pl.when(j == 0)
    def _():
        acc_ref[...] = jnp.zeros_like(acc_ref)

    xc = r_col_ref[:, 0:1]
    yc = r_col_ref[:, 1:2]
    zc = r_col_ref[:, 2:3]
    xr = r_row_ref[0:1, :]
    yr = r_row_ref[1:2, :]
    zr = r_row_ref[2:3, :]

    # d[i, j] = R_j - R_i  (vector from atom i to atom j)
    dx = xr - xc
    dy = yr - yc
    dz = zr - zc
    r2 = dx * dx + dy * dy + dz * dz

    # Padded slots sit > cutoff from every atom (and each other), and the
    # self-pair diagonal has r2 == 0 exactly, so the mask is two compares.
    maskf = ((r2 > _R2_MIN) & (r2 < cutoff * cutoff)).astype(jnp.float32)

    # keep the reciprocal finite on masked entries (diagonal has r2 == 0)
    r2_safe = r2 + (1.0 - maskf)
    # EUP approximate reciprocal + one Newton step: ~2^-24 rel error, off VALU
    inv_r2 = pl.reciprocal(r2_safe, approx=True)
    inv_r2 = inv_r2 * (2.0 - r2_safe * inv_r2)

    s2 = (sigma * sigma) * inv_r2
    s6 = s2 * s2 * s2
    s12 = s6 * s6

    # pair energy u = 4 eps (s12 - s6); reduced (XLU) and consumed before g so
    # fewer (TILE_I, TILE_J) temporaries are simultaneously live.
    u = (4.0 * epsilon) * (s12 - s6) * maskf
    e_part = 0.5 * jnp.sum(u, axis=1, keepdims=True)          # (TILE_I, 1)

    # g = u'(r) / r  (drives both forces and the virial)
    g = ((24.0 * epsilon) * s6 - (48.0 * epsilon) * s12) * inv_r2 * maskf

    # all 13 cross-lane j-reductions as ONE MXU matmul against the moment block:
    #   m[:, 0]      = S0    = sum_j g
    #   m[:, 1+a]    = S1_a  = sum_j g * R_j,a
    #   m[:, 4+3a+b] = S2_ab = sum_j g * R_j,a * R_j,b
    m = jnp.dot(g, p_ref[...], preferred_element_type=jnp.float32)

    acc_ref[...] += m                    # P cols 13..15 are zero -> untouched
    acc_ref[:, 13:14] += e_part          # energy rides in lane 13

    @pl.when(j == pl.num_programs(1) - 1)
    def _():
        acc = acc_ref[...]
        s0 = acc[:, 0:1]
        s1 = acc[:, 1:4]
        e = acc[:, 13:14]
        xi = r_col_ref[:, 0:3]

        # forces: F_i,a = sum_j g (R_j,a - R_i,a) = S1_a - R_i,a * S0
        forces = s1 - xi * s0

        # per-atom virial partials:
        #   w_i,ab = sum_j g d_a d_b
        #          = S2_ab - R_i,a S1_b - R_i,b S1_a + R_i,a R_i,b S0
        xs = (xc, yc, zc)
        s1s = (acc[:, 1:2], acc[:, 2:3], acc[:, 3:4])
        w_blocks = []
        for a in range(3):
            lo = 4 + 3 * a
            w_blocks.append(acc[:, lo:lo + 3] - xs[a] * s1 - xi * s1s[a]
                            + xs[a] * xi * s0)

        zeros_pad = jnp.zeros((e.shape[0], LANES - 13), jnp.float32)
        # exactly one dense, unmasked 128-lane store per i tile
        out_ref[...] = jnp.concatenate([e, forces] + w_blocks + [zeros_pad],
                                       axis=1)


class LennardJonesGraphPES:
    """JAX/Pallas analogue of graph_pes.GraphPESModel + pairwise LJ forward."""

    def __init__(self, cutoff: float, epsilon: float = 0.5, sigma: float = 1.0):
        # deterministic "parameters"/buffers (mirrors register_buffer in __init__)
        self.cutoff = float(cutoff)
        self.three_body_cutoff = 0.0
        self.epsilon = float(epsilon)
        self.sigma = float(sigma)
        self.implemented_properties = ["local_energies"]
        # TODO(synk): state_dict / extra_state / pre_fit machinery has no Pallas
        # equivalent and is omitted.

    def _forward_pallas(self, R):
        n = R.shape[0]
        R = R.astype(jnp.float32)
        n_pad = pl.cdiv(n, TILE_I) * TILE_I           # multiple of 128

        # j-block width: largest of {TILE_J_MAX, n_pad, 512, 256, 128} dividing
        # n_pad (always terminates at 128, keeping the 128-lane alignment)
        tile_j = min(TILE_J_MAX, n_pad)
        while n_pad % tile_j:
            tile_j //= 2

        # centre coordinates: outputs are translation-invariant, and smaller
        # |R| keeps the MXU moment reconstruction well conditioned
        Rc = R - jnp.mean(R, axis=0, keepdims=True)

        # padded slots: mutually > cutoff apart and > cutoff from all real atoms
        n_fill = n_pad - n
        far = jnp.max(jnp.abs(Rc)) + 2.0 * self.cutoff
        k = jnp.arange(n_fill, dtype=jnp.float32)
        pad_pos = jnp.stack(
            [far + 2.0 * self.cutoff * (k + 1.0),
             jnp.full((n_fill,), 0.0, jnp.float32) + far,
             jnp.full((n_fill,), 0.0, jnp.float32) + far], axis=1)
        Rp = jnp.concatenate([Rc, pad_pos], axis=0)                   # (n_pad, 3)

        r_col = jnp.zeros((n_pad, 8), jnp.float32).at[:, :3].set(Rp)
        r_row = jnp.zeros((8, n_pad), jnp.float32).at[:3, :].set(Rp.T)

        # narrow moment matrix P = [1 | R_j | R_j outer R_j | 0 0 0] (16 lanes)
        outer = (Rp[:, :, None] * Rp[:, None, :]).reshape(n_pad, 9)
        p = jnp.zeros((n_pad, P_COLS), jnp.float32)
        p = p.at[:, 0].set(1.0).at[:, 1:4].set(Rp).at[:, 4:13].set(outer)

        kernel = functools.partial(
            _lj_pair_kernel, cutoff=self.cutoff,
            epsilon=self.epsilon, sigma=self.sigma)

        grid = (n_pad // TILE_I, n_pad // tile_j)
        n_pairs = int(n_pad) * int(n_pad)
        cost = pl.CostEstimate(
            flops=n_pairs * (30 + 2 * P_COLS),
            transcendentals=n_pairs,
            bytes_accessed=int(
                grid[0] * (TILE_I * 8 * 4 + 8 * n_pad * 4 + n_pad * P_COLS * 4)
                + n_pad * LANES * 4),
        )

        slab = pl.pallas_call(
            kernel,
            out_shape=jax.ShapeDtypeStruct((n_pad, LANES), jnp.float32),
            grid_spec=pltpu.PrefetchScalarGridSpec(
                num_scalar_prefetch=0,
                grid=grid,
                in_specs=[
                    pl.BlockSpec((TILE_I, 8), lambda i, j: (i, 0)),
                    pl.BlockSpec((8, tile_j), lambda i, j: (0, j)),
                    pl.BlockSpec((tile_j, P_COLS), lambda i, j: (j, 0)),
                ],
                out_specs=pl.BlockSpec((TILE_I, LANES), lambda i, j: (i, 0)),
                scratch_shapes=[pltpu.VMEM((TILE_I, P_COLS), jnp.float32)],
            ),
            # i axis shards across cores (v7x megacore); j is the reduction
            compiler_params=pltpu.CompilerParams(
                dimension_semantics=("parallel", "arbitrary"),
                vmem_limit_bytes=32 * 1024 * 1024),
            cost_estimate=cost,
        )(r_col, r_row, p)

        local_energies = slab[:n, 0]
        forces = slab[:n, 1:4]
        virial_partials = slab[:n, 4:13]
        return local_energies, forces, virial_partials

    def predict(self, R, cell, properties):
        """Mirrors GraphPESModel.predict for a single structure."""
        local_energies, forces, w = self._forward_pallas(R)

        # energy = sum_per_structure(local_energies)
        energy = jnp.sum(local_energies)
        # dE/dC for the symmetric cell-strain parameterisation used in predict()
        dE_dC = 0.5 * jnp.sum(w, axis=0).reshape(3, 3)
        cell_volume = jnp.linalg.det(cell.astype(jnp.float32))

        predictions = {
            "local_energies": local_energies,
            "energy": energy,
            "forces": forces,
            "virial": -dE_dC,
            "stress": dE_dC / cell_volume,
        }
        return {k: predictions[k] for k in properties}


def _reference_energy(R, change_to_cell, *, cutoff, epsilon, sigma):
    """Pure-JAX reference mirroring predict()'s strained-energy definition."""
    sym = 0.5 * (change_to_cell + change_to_cell.T)
    scaling = jnp.eye(3, dtype=R.dtype) + sym
    Rs = R @ scaling
    diff = Rs[None, :, :] - Rs[:, None, :]
    r2 = jnp.sum(diff * diff, axis=-1)
    n = R.shape[0]
    mask = (r2 < cutoff * cutoff) & (~jnp.eye(n, dtype=bool))
    r2s = jnp.where(mask, r2, 1.0)
    s6 = (sigma * sigma / r2s) ** 3
    u = jnp.where(mask, 4.0 * epsilon * (s6 * s6 - s6), 0.0)
    local = 0.5 * jnp.sum(u, axis=1)
    return jnp.sum(local), local


if __name__ == "__main__":
    key = jax.random.PRNGKey(0)
    n_atoms = 16

    # deterministic jittered 4x2x2 lattice -> no pathologically close pairs
    ix = jnp.arange(n_atoms)
    base = jnp.stack(
        [(ix % 4).astype(jnp.float32) * 1.2,
         ((ix // 4) % 2).astype(jnp.float32) * 1.2,
         ((ix // 8) % 2).astype(jnp.float32) * 1.2], axis=1)
    jitter = 0.1 * jax.random.uniform(key, (n_atoms, 3), minval=-1.0, maxval=1.0)
    R = (base + jitter).astype(jnp.float32)
    cell = (6.0 * jnp.eye(3)).astype(jnp.float32)

    model = LennardJonesGraphPES(cutoff=5.0, epsilon=0.5, sigma=1.0)
    props = ["energy", "forces", "local_energies", "stress", "virial"]
    preds = model.predict(R, cell, props)
    preds = jax.block_until_ready(preds)

    # cross-check against pure-JAX autodiff (what torch.autograd does in predict)
    zero_c = jnp.zeros((3, 3), jnp.float32)
    e_fn = functools.partial(_reference_energy, cutoff=model.cutoff,
                             epsilon=model.epsilon, sigma=model.sigma)
    (e_ref, le_ref), (dE_dR, dE_dC) = jax.value_and_grad(
        e_fn, argnums=(0, 1), has_aux=True)(R, zero_c)
    vol = jnp.linalg.det(cell)
    f_ref = -dE_dR
    virial_ref = -dE_dC
    stress_ref = dE_dC / vol

    # energies avoid the MXU entirely; gradient-derived quantities get a
    # slightly larger atol to cover the MXU's f32 pass decomposition and the
    # NR-refined approximate reciprocal
    tol = dict(rtol=2e-3, atol=2e-3)
    grad_tol = dict(rtol=2e-3, atol=5e-3)
    assert jnp.allclose(preds["energy"], e_ref, **tol)
    assert jnp.allclose(preds["local_energies"], le_ref, **tol)
    assert jnp.allclose(preds["forces"], f_ref, **grad_tol)
    assert jnp.allclose(preds["virial"], virial_ref, **grad_tol)
    assert jnp.allclose(preds["stress"], stress_ref, **grad_tol)
    assert preds["local_energies"].shape == (n_atoms,)
    assert preds["forces"].shape == (n_atoms, 3)
    assert preds["stress"].shape == (3, 3)

    print("KERNEL_OK")
</pallas_src>

<mosaic_0001>
module attributes {stable_mosaic.version = 11 : i64} {
  func.func @_lj_pair_kernel(%arg0: i32, %arg1: i32, %arg2: memref<128x8xf32, #tpu.memory_space<vmem>>, %arg3: memref<8x128xf32, #tpu.memory_space<vmem>>, %arg4: memref<128x16xf32, #tpu.memory_space<vmem>>, %arg5: memref<128x128xf32, #tpu.memory_space<vmem>>, %arg6: memref<128x16xf32, #tpu.memory_space<vmem>>) attributes {dimension_semantics = [#tpu.dimension_semantics<parallel>, #tpu.dimension_semantics<arbitrary>], iteration_bounds = array<i64: 1, 1>, scalar_prefetch = 0 : i64, scratch_operands = 1 : i64, tpu.core_type = #tpu.core_type<tc>, window_params = [{transform_indices = @transform_0, window_bounds = array<i64: 128, 8>}, {transform_indices = @transform_1, window_bounds = array<i64: 8, 128>}, {transform_indices = @transform_2, window_bounds = array<i64: 128, 16>}, {transform_indices = @transform_3, window_bounds = array<i64: 128, 128>}]} {
    %c0_i32 = arith.constant 0 : i32
    %0 = arith.cmpi eq, %arg1, %c0_i32 : i32
    %1 = arith.extui %0 : i1 to i32
    %c0_i32_0 = arith.constant 0 : i32
    %2 = arith.cmpi ne, %1, %c0_i32_0 : i32
    scf.if %2 {
      %cst_31 = arith.constant 0.000000e+00 : f32
      %69 = vector.broadcast %cst_31 : f32 to vector<128x16xf32>
      %c0_32 = arith.constant 0 : index
      %c0_33 = arith.constant 0 : index
      %70 = vector.load %arg6[%c0_32, %c0_33] : memref<128x16xf32, #tpu.memory_space<vmem>>, vector<128x16xf32>
      tpu.vector_store %arg6[%c0_32, %c0_33], %69 {strides = array<i32>} : memref<128x16xf32, #tpu.memory_space<vmem>>, vector<128x16xf32>,
    } else {
    }
    %c0 = arith.constant 0 : index
    %c0_1 = arith.constant 0 : index
    %3 = vector.load %arg2[%c0, %c0_1] : memref<128x8xf32, #tpu.memory_space<vmem>>, vector<128x1xf32>
    %c0_2 = arith.constant 0 : index
    %c1 = arith.constant 1 : index
    %4 = vector.load %arg2[%c0_2, %c1] : memref<128x8xf32, #tpu.memory_space<vmem>>, vector<128x1xf32>
    %c0_3 = arith.constant 0 : index
    %c2 = arith.constant 2 : index
    %5 = vector.load %arg2[%c0_3, %c2] : memref<128x8xf32, #tpu.memory_space<vmem>>, vector<128x1xf32>
    %c0_4 = arith.constant 0 : index
    %c0_5 = arith.constant 0 : index
    %6 = vector.load %arg3[%c0_4, %c0_5] : memref<8x128xf32, #tpu.memory_space<vmem>>, vector<1x128xf32>
    %c1_6 = arith.constant 1 : index
    %c0_7 = arith.constant 0 : index
    %7 = vector.load %arg3[%c1_6, %c0_7] : memref<8x128xf32, #tpu.memory_space<vmem>>, vector<1x128xf32>
    %c2_8 = arith.constant 2 : index
    %c0_9 = arith.constant 0 : index
    %8 = vector.load %arg3[%c2_8, %c0_9] : memref<8x128xf32, #tpu.memory_space<vmem>>, vector<1x128xf32>
    %9 = vector.broadcast %6 : vector<1x128xf32> to vector<128x128xf32>
    %10 = vector.broadcast %3 : vector<128x1xf32> to vector<128x128xf32>
    %11 = arith.subf %9, %10 : vector<128x128xf32>
    %12 = vector.broadcast %7 : vector<1x128xf32> to vector<128x128xf32>
    %13 = vector.broadcast %4 : vector<128x1xf32> to vector<128x128xf32>
    %14 = arith.subf %12, %13 : vector<128x128xf32>
    %15 = vector.broadcast %8 : vector<1x128xf32> to vector<128x128xf32>
    %16 = vector.broadcast %5 : vector<128x1xf32> to vector<128x128xf32>
    %17 = arith.subf %15, %16 : vector<128x128xf32>
    %18 = arith.mulf %11, %11 : vector<128x128xf32>
    %19 = arith.mulf %14, %14 : vector<128x128xf32>
    %20 = arith.addf %18, %19 : vector<128x128xf32>
    %21 = arith.mulf %17, %17 : vector<128x128xf32>
    %22 = arith.addf %20, %21 : vector<128x128xf32>
    %cst = arith.constant 9.99999997E-7 : f32
    %23 = vector.broadcast %cst : f32 to vector<128x128xf32>
    %24 = arith.cmpf ogt, %22, %23 : vector<128x128xf32>
    %cst_10 = arith.constant 2.500000e+01 : f32
    %25 = vector.broadcast %cst_10 : f32 to vector<128x128xf32>
    %26 = arith.cmpf olt, %22, %25 : vector<128x128xf32>
    %27 = arith.andi %24, %26 : vector<128x128xi1>
    %28 = arith.extui %27 : vector<128x128xi1> to vector<128x128xi32>
    %29 = arith.sitofp %28 : vector<128x128xi32> to vector<128x128xf32>
    %cst_11 = arith.constant 1.000000e+00 : f32
    %30 = vector.broadcast %cst_11 : f32 to vector<128x128xf32>
    %31 = arith.subf %30, %29 : vector<128x128xf32>
    %32 = arith.addf %22, %31 : vector<128x128xf32>
    %33 = tpu.reciprocal %32 {approx = true} : vector<128x128xf32> -> vector<128x128xf32>
    %34 = arith.mulf %32, %33 : vector<128x128xf32>
    %cst_12 = arith.constant 2.000000e+00 : f32
    %35 = vector.broadcast %cst_12 : f32 to vector<128x128xf32>
    %36 = arith.subf %35, %34 : vector<128x128xf32>
    %37 = arith.mulf %33, %36 : vector<128x128xf32>
    %cst_13 = arith.constant 1.000000e+00 : f32
    %38 = vector.broadcast %cst_13 : f32 to vector<128x128xf32>
    %39 = arith.mulf %38, %37 : vector<128x128xf32>
    %40 = arith.mulf %39, %39 : vector<128x128xf32>
    %41 = arith.mulf %40, %39 : vector<128x128xf32>
    %42 = arith.mulf %41, %41 : vector<128x128xf32>
    %43 = arith.subf %42, %41 : vector<128x128xf32>
    %cst_14 = arith.constant 2.000000e+00 : f32
    %44 = vector.broadcast %cst_14 : f32 to vector<128x128xf32>
    %45 = arith.mulf %44, %43 : vector<128x128xf32>
    %46 = arith.mulf %45, %29 : vector<128x128xf32>
    %cst_15 = arith.constant dense<0.000000e+00> : vector<128xf32>
    %47 = vector.multi_reduction <add>, %46, %cst_15 [1] : vector<128x128xf32> to vector<128xf32>
    %48 = vector.shape_cast %47 : vector<128xf32> to vector<128x1xf32>
    %cst_16 = arith.constant 5.000000e-01 : f32
    %49 = vector.broadcast %cst_16 : f32 to vector<128x1xf32>
    %50 = arith.mulf %49, %48 : vector<128x1xf32>
    %cst_17 = arith.constant 1.200000e+01 : f32
    %51 = vector.broadcast %cst_17 : f32 to vector<128x128xf32>
    %52 = arith.mulf %51, %41 : vector<128x128xf32>
    %cst_18 = arith.constant 2.400000e+01 : f32
    %53 = vector.broadcast %cst_18 : f32 to vector<128x128xf32>
    %54 = arith.mulf %53, %42 : vector<128x128xf32>
    %55 = arith.subf %52, %54 : vector<128x128xf32>
    %56 = arith.mulf %55, %37 : vector<128x128xf32>
    %57 = arith.mulf %56, %29 : vector<128x128xf32>
    %c0_19 = arith.constant 0 : index
    %c0_20 = arith.constant 0 : index
    %58 = vector.load %arg4[%c0_19, %c0_20] : memref<128x16xf32, #tpu.memory_space<vmem>>, vector<128x16xf32>
    %cst_21 = arith.constant dense<0.000000e+00> : vector<128x16xf32>
    %59 = tpu.matmul %57, %58, %cst_21 {dimension_numbers = #tpu.dot_dimension_numbers<[1], [0], [0], [1], [0, 0, 1, 1], [], []>} : vector<128x128xf32>, vector<128x16xf32>, vector<128x16xf32> -> vector<128x16xf32>
    %c0_22 = arith.constant 0 : index
    %c0_23 = arith.constant 0 : index
    %60 = vector.load %arg6[%c0_22, %c0_23] : memref<128x16xf32, #tpu.memory_space<vmem>>, vector<128x16xf32>
    %61 = arith.addf %60, %59 : vector<128x16xf32>
    %c0_24 = arith.constant 0 : index
    %c0_25 = arith.constant 0 : index
    %62 = vector.load %arg6[%c0_24, %c0_25] : memref<128x16xf32, #tpu.memory_space<vmem>>, vector<128x16xf32>
    tpu.vector_store %arg6[%c0_24, %c0_25], %61 {strides = array<i32>} : memref<128x16xf32, #tpu.memory_space<vmem>>, vector<128x16xf32>,
    %c0_26 = arith.constant 0 : index
    %c13 = arith.constant 13 : index
    %63 = vector.load %arg6[%c0_26, %c13] : memref<128x16xf32, #tpu.memory_space<vmem>>, vector<128x1xf32>
    %64 = arith.addf %63, %50 : vector<128x1xf32>
    %c0_27 = arith.constant 0 : index
    %c13_28 = arith.constant 13 : index
    %65 = vector.load %arg6[%c0_27, %c13_28] : memref<128x16xf32, #tpu.memory_space<vmem>>, vector<128x1xf32>
    tpu.vector_store %arg6[%c0_27, %c13_28], %64 {strides = array<i32>} : memref<128x16xf32, #tpu.memory_space<vmem>>, vector<128x1xf32>,
    %c0_i32_29 = arith.constant 0 : i32
    %66 = arith.cmpi eq, %arg1, %c0_i32_29 : i32
    %67 = arith.extui %66 : i1 to i32
    %c0_i32_30 = arith.constant 0 : i32
    %68 = arith.cmpi ne, %67, %c0_i32_30 : i32
    scf.if %68 {
      %c0_31 = arith.constant 0 : index
      %c0_32 = arith.constant 0 : index
      %69 = vector.load %arg6[%c0_31, %c0_32] : memref<128x16xf32, #tpu.memory_space<vmem>>, vector<128x16xf32>
      %70 = vector.extract_strided_slice %69 {offsets = [0, 0], sizes = [128, 1], strides = [1, 1]} : vector<128x16xf32> to vector<128x1xf32>
      %71 = vector.extract_strided_slice %69 {offsets = [0, 1], sizes = [128, 3], strides = [1, 1]} : vector<128x16xf32> to vector<128x3xf32>
      %72 = vector.extract_strided_slice %69 {offsets = [0, 13], sizes = [128, 1], strides = [1, 1]} : vector<128x16xf32> to vector<128x1xf32>
      %c0_33 = arith.constant 0 : index
      %c0_34 = arith.constant 0 : index
      %73 = vector.load %arg2[%c0_33, %c0_34] : memref<128x8xf32, #tpu.memory_space<vmem>>, vector<128x3xf32>
      %74 = vector.broadcast %70 : vector<128x1xf32> to vector<128x3xf32>
      %75 = arith.mulf %73, %74 : vector<128x3xf32>
      %76 = arith.subf %71, %75 : vector<128x3xf32>
      %77 = vector.extract_strided_slice %69 {offsets = [0, 1], sizes = [128, 1], strides = [1, 1]} : vector<128x16xf32> to vector<128x1xf32>
      %78 = vector.extract_strided_slice %69 {offsets = [0, 2], sizes = [128, 1], strides = [1, 1]} : vector<128x16xf32> to vector<128x1xf32>
      %79 = vector.extract_strided_slice %69 {offsets = [0, 3], sizes = [128, 1], strides = [1, 1]} : vector<128x16xf32> to vector<128x1xf32>
      %80 = vector.extract_strided_slice %69 {offsets = [0, 4], sizes = [128, 3], strides = [1, 1]} : vector<128x16xf32> to vector<128x3xf32>
      %81 = vector.broadcast %3 : vector<128x1xf32> to vector<128x3xf32>
      %82 = arith.mulf %81, %71 : vector<128x3xf32>
      %83 = arith.subf %80, %82 : vector<128x3xf32>
      %84 = vector.broadcast %77 : vector<128x1xf32> to vector<128x3xf32>
      %85 = arith.mulf %73, %84 : vector<128x3xf32>
      %86 = arith.subf %83, %85 : vector<128x3xf32>
      %87 = vector.broadcast %3 : vector<128x1xf32> to vector<128x3xf32>
      %88 = arith.mulf %87, %73 : vector<128x3xf32>
      %89 = vector.broadcast %70 : vector<128x1xf32> to vector<128x3xf32>
      %90 = arith.mulf %88, %89 : vector<128x3xf32>
      %91 = arith.addf %86, %90 : vector<128x3xf32>
      %92 = vector.extract_strided_slice %69 {offsets = [0, 7], sizes = [128, 3], strides = [1, 1]} : vector<128x16xf32> to vector<128x3xf32>
      %93 = vector.broadcast %4 : vector<128x1xf32> to vector<128x3xf32>
      %94 = arith.mulf %93, %71 : vector<128x3xf32>
      %95 = arith.subf %92, %94 : vector<128x3xf32>
      %96 = vector.broadcast %78 : vector<128x1xf32> to vector<128x3xf32>
      %97 = arith.mulf %73, %96 : vector<128x3xf32>
      %98 = arith.subf %95, %97 : vector<128x3xf32>
      %99 = vector.broadcast %4 : vector<128x1xf32> to vector<128x3xf32>
      %100 = arith.mulf %99, %73 : vector<128x3xf32>
      %101 = vector.broadcast %70 : vector<128x1xf32> to vector<128x3xf32>
      %102 = arith.mulf %100, %101 : vector<128x3xf32>
      %103 = arith.addf %98, %102 : vector<128x3xf32>
      %104 = vector.extract_strided_slice %69 {offsets = [0, 10], sizes = [128, 3], strides = [1, 1]} : vector<128x16xf32> to vector<128x3xf32>
      %105 = vector.broadcast %5 : vector<128x1xf32> to vector<128x3xf32>
      %106 = arith.mulf %105, %71 : vector<128x3xf32>
      %107 = arith.subf %104, %106 : vector<128x3xf32>
      %108 = vector.broadcast %79 : vector<128x1xf32> to vector<128x3xf32>
      %109 = arith.mulf %73, %108 : vector<128x3xf32>
      %110 = arith.subf %107, %109 : vector<128x3xf32>
      %111 = vector.broadcast %5 : vector<128x1xf32> to vector<128x3xf32>
      %112 = arith.mulf %111, %73 : vector<128x3xf32>
      %113 = vector.broadcast %70 : vector<128x1xf32> to vector<128x3xf32>
      %114 = arith.mulf %112, %113 : vector<128x3xf32>
      %115 = arith.addf %110, %114 : vector<128x3xf32>
      %cst_35 = arith.constant 0.000000e+00 : f32
      %116 = vector.broadcast %cst_35 : f32 to vector<128x115xf32>
      %117 = tpu.concatenate %72, %76, %91, %103, %115, %116 in 1 : vector<128x1xf32>, vector<128x3xf32>, vector<128x3xf32>, vector<128x3xf32>, vector<128x3xf32>, vector<128x115xf32> -> vector<128x128xf32>
      %c0_36 = arith.constant 0 : index
      %c0_37 = arith.constant 0 : index
      %118 = vector.load %arg5[%c0_36, %c0_37] : memref<128x128xf32, #tpu.memory_space<vmem>>, vector<128x128xf32>
      tpu.vector_store %arg5[%c0_36, %c0_37], %117 {strides = array<i32>} : memref<128x128xf32, #tpu.memory_space<vmem>>, vector<128x128xf32>,
    } else {
    }
    return
  }
  func.func @transform_0(%arg0: i32, %arg1: i32) -> (i32, i32) {
    %c0_i32 = arith.constant 0 : i32
    %c0_i32_0 = arith.constant 0 : i32
    return %arg0, %c0_i32 : i32, i32
  }
  func.func @transform_1(%arg0: i32, %arg1: i32) -> (i32, i32) {
    %c0_i32 = arith.constant 0 : i32
    %c0_i32_0 = arith.constant 0 : i32
    return %c0_i32, %arg1 : i32, i32
  }
  func.func @transform_2(%arg0: i32, %arg1: i32) -> (i32, i32) {
    %c0_i32 = arith.constant 0 : i32
    %c0_i32_0 = arith.constant 0 : i32
    return %arg1, %c0_i32 : i32, i32
  }
  func.func @transform_3(%arg0: i32, %arg1: i32) -> (i32, i32) {
    %c0_i32 = arith.constant 0 : i32
    %c0_i32_0 = arith.constant 0 : i32
    return %arg0, %c0_i32 : i32, i32
  }
}

</mosaic_0001>

<llo_original>
// kernel: tpu_custom_call.1
$region0: #{tpu_custom_call.1}
  #allocation0 [shape = 'u32[]', space=smem, size = 0x4, offset = 0x4, fixed_abs, tag = 'smem constant byte address 0x4 - core index']
  #allocation1 [shape = 'u32[72,128]{1,0:T(1,128)}', space=vmem, size = 0x9000, scoped, tag = 'internal scratch']
  #allocation2 [shape = 'f32[128,16]{1,0:T(8,128)}', space=vmem, size = 0x10000, scoped, tag = 'scratch operand']
  %s0 = inlined_call_operand.vmem [shape: f32[128,8], index: 0, kind: input, shape index: {}]
  %s1 = inlined_call_operand.vmem [shape: f32[8,128], index: 1, kind: input, shape index: {}]
  %s2 = inlined_call_operand.vmem [shape: f32[128,16], index: 2, kind: input, shape index: {}]
  %s3 = inlined_call_operand.hbm [shape: f32[128,128], index: 3, kind: output, shape index: {}]
  %s4 = sld [smem:[#allocation0]]
  $region30: #{tpu_custom_call.1} parent=0
    _
  %s6 = ssub.s32 1, %s4
  %s7 = scalar_select 0, %s6, %s4
  $region1: #{tpu_custom_call.1} parent=0
    #allocation3 [shape = 'u8[65536]{0}', space=vmem, size = 0x10000, scoped, tag = 'output window, operand 0, single buffered']
    #allocation4 [shape = 's32[1]{0}', space=sflag, size = 0x4, scoped, tag = 'scoped memory for tpu_custom_call.1']
    %8 = vsyncpa [#allocation4], 0
    // Predicated region
    $region2: #{tpu_custom_call.1} parent=1 // pred_check
      _
    $region3: #{tpu_custom_call.1} parent=1 // pred_check_branch
      %10 = sbr.rel (0) target = $region5
    $region4: #{tpu_custom_call.1} parent=1 // pred_region
      _
    $region5: #{tpu_custom_call.1} parent=1 // pred_fallthru
      _
    // Predicated region
    $region6: #{tpu_custom_call.1} parent=1 // pred_check
      _
    $region7: #{tpu_custom_call.1} parent=1 // pred_check_branch
      %12 = sbr.rel (0) target = $region9
    $region8: #{tpu_custom_call.1} parent=1 // pred_region
      _
    $region9: #{tpu_custom_call.1} parent=1 // pred_fallthru
      _
    // Predicated region
    $region10: #{tpu_custom_call.1} parent=1 // pred_check
      _
    $region11: #{tpu_custom_call.1} parent=1 // pred_check_branch
      %14 = sbr.rel (0) target = $region13
    $region12: #{tpu_custom_call.1} parent=1 // pred_region
      _
    $region13: #{tpu_custom_call.1} parent=1 // pred_fallthru
      _
    %p15 = scmp.eq.s32.totalorder 0, 0
    // Predicated region
    $region14: #{tpu_custom_call.1} parent=1 // pred_check
      %p16 = pneg %p15
    $region15: #{tpu_custom_call.1} parent=1 // pred_check_branch
      %18 = sbr.rel (%p16) target = $region17
    $region16: #{tpu_custom_call.1} parent=1 // pred_region
      %vm19 = vcmask 130048
      %20 = vst.msk [vmem:[#allocation2] sm:$0xff] %vm19, 0.0
      %21 = vst.msk [vmem:[#allocation2 + $0x8] sm:$0xff] %vm19, 0.0
      %22 = vst.msk [vmem:[#allocation2 + $0x10] sm:$0xff] %vm19, 0.0
      %23 = vst.msk [vmem:[#allocation2 + $0x18] sm:$0xff] %vm19, 0.0
      %24 = vst.msk [vmem:[#allocation2 + $0x20] sm:$0xff] %vm19, 0.0
      %25 = vst.msk [vmem:[#allocation2 + $0x28] sm:$0xff] %vm19, 0.0
      %26 = vst.msk [vmem:[#allocation2 + $0x30] sm:$0xff] %vm19, 0.0
      %27 = vst.msk [vmem:[#allocation2 + $0x38] sm:$0xff] %vm19, 0.0
      %28 = vst.msk [vmem:[#allocation2 + $0x40] sm:$0xff] %vm19, 0.0
      %29 = vst.msk [vmem:[#allocation2 + $0x48] sm:$0xff] %vm19, 0.0
      %30 = vst.msk [vmem:[#allocation2 + $0x50] sm:$0xff] %vm19, 0.0
      %31 = vst.msk [vmem:[#allocation2 + $0x58] sm:$0xff] %vm19, 0.0
      %32 = vst.msk [vmem:[#allocation2 + $0x60] sm:$0xff] %vm19, 0.0
      %33 = vst.msk [vmem:[#allocation2 + $0x68] sm:$0xff] %vm19, 0.0
      %34 = vst.msk [vmem:[#allocation2 + $0x70] sm:$0xff] %vm19, 0.0
      %35 = vst.msk [vmem:[#allocation2 + $0x78] sm:$0xff] %vm19, 0.0
    $region17: #{tpu_custom_call.1} parent=1 // pred_fallthru
      _
    %v36 = vld [vmem:[%s0] sm:$0xff]
    %v37 = vld [vmem:[%s0 + $0x8] sm:$0xff]
    %v38 = vld [vmem:[%s0 + $0x10] sm:$0xff]
    %v39 = vld [vmem:[%s0 + $0x18] sm:$0xff]
    %v40 = vld [vmem:[%s0 + $0x20] sm:$0xff]
    %v41 = vld [vmem:[%s0 + $0x28] sm:$0xff]
    %v42 = vld [vmem:[%s0 + $0x30] sm:$0xff]
    %v43 = vld [vmem:[%s0 + $0x38] sm:$0xff]
    %v44 = vld [vmem:[%s0 + $0x40] sm:$0xff]
    %v45 = vld [vmem:[%s0 + $0x48] sm:$0xff]
    %v46 = vld [vmem:[%s0 + $0x50] sm:$0xff]
    %v47 = vld [vmem:[%s0 + $0x58] sm:$0xff]
    %v48 = vld [vmem:[%s0 + $0x60] sm:$0xff]
    %v49 = vld [vmem:[%s0 + $0x68] sm:$0xff]
    %v50 = vld [vmem:[%s0 + $0x70] sm:$0xff]
    %v51 = vld [vmem:[%s0 + $0x78] sm:$0xff]
    %v52 = vld [vmem:[%s1] sm:$0x1]
    %v53 = vld [vmem:[%s1 + $0x1] sm:$0x1]
    %v54 = vld [vmem:[%s1 + $0x2] sm:$0x1]
    %v55 = vperm.slane %v52, 0
    %57 = vset.pattern.permute.xlu0 0
    %58 = vperm.xlu0 %57, %v36
    %v59 = vpop.permute.xlu0 %58
    %62 = vset.pattern.permute.xlu0 0
    %63 = vperm.xlu0 %62, %v37
    %v64 = vpop.permute.xlu0 %63
    %67 = vset.pattern.permute.xlu0 0
    %68 = vperm.xlu0 %67, %v38
    %v69 = vpop.permute.xlu0 %68
    %72 = vset.pattern.permute.xlu0 0
    %73 = vperm.xlu0 %72, %v39
    %v74 = vpop.permute.xlu0 %73
    %77 = vset.pattern.permute.xlu0 0
    %78 = vperm.xlu0 %77, %v40
    %v79 = vpop.permute.xlu0 %78
    %82 = vset.pattern.permute.xlu0 0
    %83 = vperm.xlu0 %82, %v41
    %v84 = vpop.permute.xlu0 %83
    %87 = vset.pattern.permute.xlu0 0
    %88 = vperm.xlu0 %87, %v42
    %v89 = vpop.permute.xlu0 %88
    %92 = vset.pattern.permute.xlu0 0
    %93 = vperm.xlu0 %92, %v43
    %v94 = vpop.permute.xlu0 %93
    %97 = vset.pattern.permute.xlu0 0
    %98 = vperm.xlu0 %97, %v44
    %v99 = vpop.permute.xlu0 %98
    %102 = vset.pattern.permute.xlu0 0
    %103 = vperm.xlu0 %102, %v45
    %v104 = vpop.permute.xlu0 %103
    %107 = vset.pattern.permute.xlu0 0
    %108 = vperm.xlu0 %107, %v46
    %v109 = vpop.permute.xlu0 %108
    %112 = vset.pattern.permute.xlu0 0
    %113 = vperm.xlu0 %112, %v47
    %v114 = vpop.permute.xlu0 %113
    %117 = vset.pattern.permute.xlu0 0
    %118 = vperm.xlu0 %117, %v48
    %v119 = vpop.permute.xlu0 %118
    %122 = vset.pattern.permute.xlu0 0
    %123 = vperm.xlu0 %122, %v49
    %v124 = vpop.permute.xlu0 %123
    %127 = vset.pattern.permute.xlu0 0
    %128 = vperm.xlu0 %127, %v50
    %v129 = vpop.permute.xlu0 %128
    %132 = vset.pattern.permute.xlu0 0
    %133 = vperm.xlu0 %132, %v51
    %v134 = vpop.permute.xlu0 %133
    %v136 = vsub.f32 %v55, %v59
    %v137 = vsub.f32 %v55, %v64
    %v138 = vsub.f32 %v55, %v69
    %v139 = vsub.f32 %v55, %v74
    %v140 = vsub.f32 %v55, %v79
    %v141 = vsub.f32 %v55, %v84
    %v142 = vsub.f32 %v55, %v89
    %v143 = vsub.f32 %v55, %v94
    %v144 = vsub.f32 %v55, %v99
    %v145 = vsub.f32 %v55, %v104
    %v146 = vsub.f32 %v55, %v109
    %v147 = vsub.f32 %v55, %v114
    %v148 = vsub.f32 %v55, %v119
    %v149 = vsub.f32 %v55, %v124
    %v150 = vsub.f32 %v55, %v129
    %v151 = vsub.f32 %v55, %v134
    %v152 = vperm.slane %v53, 0
    %153 = vset.pattern.permute.xlu0 1
    %154 = vperm.xlu0 %153, %v36
    %v155 = vpop.permute.xlu0 %154
    %157 = vset.pattern.permute.xlu0 1
    %158 = vperm.xlu0 %157, %v37
    %v159 = vpop.permute.xlu0 %158
    %161 = vset.pattern.permute.xlu0 1
    %162 = vperm.xlu0 %161, %v38
    %v163 = vpop.permute.xlu0 %162
    %165 = vset.pattern.permute.xlu0 1
    %166 = vperm.xlu0 %165, %v39
    %v167 = vpop.permute.xlu0 %166
    %169 = vset.pattern.permute.xlu0 1
    %170 = vperm.xlu0 %169, %v40
    %v171 = vpop.permute.xlu0 %170
    %173 = vset.pattern.permute.xlu0 1
    %174 = vperm.xlu0 %173, %v41
    %v175 = vpop.permute.xlu0 %174
    %177 = vset.pattern.permute.xlu0 1
    %178 = vperm.xlu0 %177, %v42
    %v179 = vpop.permute.xlu0 %178
    %181 = vset.pattern.permute.xlu0 1
    %182 = vperm.xlu0 %181, %v43
    %v183 = vpop.permute.xlu0 %182
    %185 = vset.pattern.permute.xlu0 1
    %186 = vperm.xlu0 %185, %v44
    %v187 = vpop.permute.xlu0 %186
    %189 = vset.pattern.permute.xlu0 1
    %190 = vperm.xlu0 %189, %v45
    %v191 = vpop.permute.xlu0 %190
    %193 = vset.pattern.permute.xlu0 1
    %194 = vperm.xlu0 %193, %v46
    %v195 = vpop.permute.xlu0 %194
    %197 = vset.pattern.permute.xlu0 1
    %198 = vperm.xlu0 %197, %v47
    %v199 = vpop.permute.xlu0 %198
    %201 = vset.pattern.permute.xlu0 1
    %202 = vperm.xlu0 %201, %v48
    %v203 = vpop.permute.xlu0 %202
    %205 = vset.pattern.permute.xlu0 1
    %206 = vperm.xlu0 %205, %v49
    %v207 = vpop.permute.xlu0 %206
    %209 = vset.pattern.permute.xlu0 1
    %210 = vperm.xlu0 %209, %v50
    %v211 = vpop.permute.xlu0 %210
    %213 = vset.pattern.permute.xlu0 1
    %214 = vperm.xlu0 %213, %v51
    %v215 = vpop.permute.xlu0 %214
    %v217 = vsub.f32 %v152, %v155
    %v218 = vsub.f32 %v152, %v159
    %v219 = vsub.f32 %v152, %v163
    %v220 = vsub.f32 %v152, %v167
    %v221 = vsub.f32 %v152, %v171
    %v222 = vsub.f32 %v152, %v175
    %v223 = vsub.f32 %v152, %v179
    %v224 = vsub.f32 %v152, %v183
    %v225 = vsub.f32 %v152, %v187
    %v226 = vsub.f32 %v152, %v191
    %v227 = vsub.f32 %v152, %v195
    %v228 = vsub.f32 %v152, %v199
    %v229 = vsub.f32 %v152, %v203
    %v230 = vsub.f32 %v152, %v207
    %v231 = vsub.f32 %v152, %v211
    %v232 = vsub.f32 %v152, %v215
    %v233 = vperm.slane %v54, 0
    %234 = vset.pattern.permute.xlu0 2
    %235 = vperm.xlu0 %234, %v36
    %v236 = vpop.permute.xlu0 %235
    %238 = vset.pattern.permute.xlu0 2
    %239 = vperm.xlu0 %238, %v37
    %v240 = vpop.permute.xlu0 %239
    %242 = vset.pattern.permute.xlu0 2
    %243 = vperm.xlu0 %242, %v38
    %v244 = vpop.permute.xlu0 %243
    %246 = vset.pattern.permute.xlu0 2
    %247 = vperm.xlu0 %246, %v39
    %v248 = vpop.permute.xlu0 %247
    %250 = vset.pattern.permute.xlu0 2
    %251 = vperm.xlu0 %250, %v40
    %v252 = vpop.permute.xlu0 %251
    %254 = vset.pattern.permute.xlu0 2
    %255 = vperm.xlu0 %254, %v41
    %v256 = vpop.permute.xlu0 %255
    %258 = vset.pattern.permute.xlu0 2
    %259 = vperm.xlu0 %258, %v42
    %v260 = vpop.permute.xlu0 %259
    %262 = vset.pattern.permute.xlu0 2
    %263 = vperm.xlu0 %262, %v43
    %v264 = vpop.permute.xlu0 %263
    %266 = vset.pattern.permute.xlu0 2
    %267 = vperm.xlu0 %266, %v44
    %v268 = vpop.permute.xlu0 %267
    %270 = vset.pattern.permute.xlu0 2
    %271 = vperm.xlu0 %270, %v45
    %v272 = vpop.permute.xlu0 %271
    %274 = vset.pattern.permute.xlu0 2
    %275 = vperm.xlu0 %274, %v46
    %v276 = vpop.permute.xlu0 %275
    %278 = vset.pattern.permute.xlu0 2
    %279 = vperm.xlu0 %278, %v47
    %v280 = vpop.permute.xlu0 %279
    %282 = vset.pattern.permute.xlu0 2
    %283 = vperm.xlu0 %282, %v48
    %v284 = vpop.permute.xlu0 %283
    %286 = vset.pattern.permute.xlu0 2
    %287 = vperm.xlu0 %286, %v49
    %v288 = vpop.permute.xlu0 %287
    %290 = vset.pattern.permute.xlu0 2
    %291 = vperm.xlu0 %290, %v50
    %v292 = vpop.permute.xlu0 %291
    %294 = vset.pattern.permute.xlu0 2
    %295 = vperm.xlu0 %294, %v51
    %v296 = vpop.permute.xlu0 %295
    %v298 = vsub.f32 %v233, %v236
    %v299 = vsub.f32 %v233, %v240
    %v300 = vsub.f32 %v233, %v244
    %v301 = vsub.f32 %v233, %v248
    %v302 = vsub.f32 %v233, %v252
    %v303 = vsub.f32 %v233, %v256
    %v304 = vsub.f32 %v233, %v260
    %v305 = vsub.f32 %v233, %v264
    %v306 = vsub.f32 %v233, %v268
    %v307 = vsub.f32 %v233, %v272
    %v308 = vsub.f32 %v233, %v276
    %v309 = vsub.f32 %v233, %v280
    %v310 = vsub.f32 %v233, %v284
    %v311 = vsub.f32 %v233, %v288
    %v312 = vsub.f32 %v233, %v292
    %v313 = vsub.f32 %v233, %v296
    %v314 = vmul.f32 %v136, %v136
    %v315 = vmul.f32 %v137, %v137
    %v316 = vmul.f32 %v138, %v138
    %v317 = vmul.f32 %v139, %v139
    %v318 = vmul.f32 %v140, %v140
    %v319 = vmul.f32 %v141, %v141
    %v320 = vmul.f32 %v142, %v142
    %v321 = vmul.f32 %v143, %v143
    %v322 = vmul.f32 %v144, %v144
    %v323 = vmul.f32 %v145, %v145
    %v324 = vmul.f32 %v146, %v146
    %v325 = vmul.f32 %v147, %v147
    %v326 = vmul.f32 %v148, %v148
    %v327 = vmul.f32 %v149, %v149
    %v328 = vmul.f32 %v150, %v150
    %v329 = vmul.f32 %v151, %v151
    %v330 = vmul.f32 %v217, %v217
    %v331 = vmul.f32 %v218, %v218
    %v332 = vmul.f32 %v219, %v219
    %v333 = vmul.f32 %v220, %v220
    %v334 = vmul.f32 %v221, %v221
    %v335 = vmul.f32 %v222, %v222
    %v336 = vmul.f32 %v223, %v223
    %v337 = vmul.f32 %v224, %v224
    %v338 = vmul.f32 %v225, %v225
    %v339 = vmul.f32 %v226, %v226
    %v340 = vmul.f32 %v227, %v227
    %v341 = vmul.f32 %v228, %v228
    %v342 = vmul.f32 %v229, %v229
    %v343 = vmul.f32 %v230, %v230
    %v344 = vmul.f32 %v231, %v231
    %v345 = vmul.f32 %v232, %v232
    %v346 = vadd.f32 %v314, %v330
    %v347 = vadd.f32 %v315, %v331
    %v348 = vadd.f32 %v316, %v332
    %v349 = vadd.f32 %v317, %v333
    %v350 = vadd.f32 %v318, %v334
    %v351 = vadd.f32 %v319, %v335
    %v352 = vadd.f32 %v320, %v336
    %v353 = vadd.f32 %v321, %v337
    %v354 = vadd.f32 %v322, %v338
    %v355 = vadd.f32 %v323, %v339
    %v356 = vadd.f32 %v324, %v340
    %v357 = vadd.f32 %v325, %v341
    %v358 = vadd.f32 %v326, %v342
    %v359 = vadd.f32 %v327, %v343
    %v360 = vadd.f32 %v328, %v344
    %v361 = vadd.f32 %v329, %v345
    %v362 = vmul.f32 %v298, %v298
    %v363 = vmul.f32 %v299, %v299
    %v364 = vmul.f32 %v300, %v300
    %v365 = vmul.f32 %v301, %v301
    %v366 = vmul.f32 %v302, %v302
    %v367 = vmul.f32 %v303, %v303
    %v368 = vmul.f32 %v304, %v304
    %v369 = vmul.f32 %v305, %v305
    %v370 = vmul.f32 %v306, %v306
    %v371 = vmul.f32 %v307, %v307
    %v372 = vmul.f32 %v308, %v308
    %v373 = vmul.f32 %v309, %v309
    %v374 = vmul.f32 %v310, %v310
    %v375 = vmul.f32 %v311, %v311
    %v376 = vmul.f32 %v312, %v312
    %v377 = vmul.f32 %v313, %v313
    %v378 = vadd.f32 %v346, %v362
    %v379 = vadd.f32 %v347, %v363
    %v380 = vadd.f32 %v348, %v364
    %v381 = vadd.f32 %v349, %v365
    %v382 = vadd.f32 %v350, %v366
    %v383 = vadd.f32 %v351, %v367
    %v384 = vadd.f32 %v352, %v368
    %v385 = vadd.f32 %v353, %v369
    %v386 = vadd.f32 %v354, %v370
    %v387 = vadd.f32 %v355, %v371
    %v388 = vadd.f32 %v356, %v372
    %v389 = vadd.f32 %v357, %v373
    %v390 = vadd.f32 %v358, %v374
    %v391 = vadd.f32 %v359, %v375
    %v392 = vadd.f32 %v360, %v376
    %v393 = vadd.f32 %v361, %v377
    %vm394 = vcmp.gt.f32.partialorder %v378, 1e-06
    %vm395 = vcmp.gt.f32.partialorder %v379, 1e-06
    %vm396 = vcmp.gt.f32.partialorder %v380, 1e-06
    %vm397 = vcmp.gt.f32.partialorder %v381, 1e-06
    %vm398 = vcmp.gt.f32.partialorder %v382, 1e-06
    %vm399 = vcmp.gt.f32.partialorder %v383, 1e-06
    %vm400 = vcmp.gt.f32.partialorder %v384, 1e-06
    %vm401 = vcmp.gt.f32.partialorder %v385, 1e-06
    %vm402 = vcmp.gt.f32.partialorder %v386, 1e-06
    %vm403 = vcmp.gt.f32.partialorder %v387, 1e-06
    %vm404 = vcmp.gt.f32.partialorder %v388, 1e-06
    %vm405 = vcmp.gt.f32.partialorder %v389, 1e-06
    %vm406 = vcmp.gt.f32.partialorder %v390, 1e-06
    %vm407 = vcmp.gt.f32.partialorder %v391, 1e-06
    %vm408 = vcmp.gt.f32.partialorder %v392, 1e-06
    %vm409 = vcmp.gt.f32.partialorder %v393, 1e-06
    %vm410 = vcmp.lt.f32.partialorder %v378, 25.0
    %vm411 = vcmp.lt.f32.partialorder %v379, 25.0
    %vm412 = vcmp.lt.f32.partialorder %v380, 25.0
    %vm413 = vcmp.lt.f32.partialorder %v381, 25.0
    %vm414 = vcmp.lt.f32.partialorder %v382, 25.0
    %vm415 = vcmp.lt.f32.partialorder %v383, 25.0
    %vm416 = vcmp.lt.f32.partialorder %v384, 25.0
    %vm417 = vcmp.lt.f32.partialorder %v385, 25.0
    %vm418 = vcmp.lt.f32.partialorder %v386, 25.0
    %vm419 = vcmp.lt.f32.partialorder %v387, 25.0
    %vm420 = vcmp.lt.f32.partialorder %v388, 25.0
    %vm421 = vcmp.lt.f32.partialorder %v389, 25.0
    %vm422 = vcmp.lt.f32.partialorder %v390, 25.0
    %vm423 = vcmp.lt.f32.partialorder %v391, 25.0
    %vm424 = vcmp.lt.f32.partialorder %v392, 25.0
    %vm425 = vcmp.lt.f32.partialorder %v393, 25.0
    %vm426 = vmand %vm394, %vm410
    %vm427 = vmand %vm395, %vm411
    %vm428 = vmand %vm396, %vm412
    %vm429 = vmand %vm397, %vm413
    %vm430 = vmand %vm398, %vm414
    %vm431 = vmand %vm399, %vm415
    %vm432 = vmand %vm400, %vm416
    %vm433 = vmand %vm401, %vm417
    %vm434 = vmand %vm402, %vm418
    %vm435 = vmand %vm403, %vm419
    %vm436 = vmand %vm404, %vm420
    %vm437 = vmand %vm405, %vm421
    %vm438 = vmand %vm406, %vm422
    %vm439 = vmand %vm407, %vm423
    %vm440 = vmand %vm408, %vm424
    %vm441 = vmand %vm409, %vm425
    %v442 = vsel %vm426, 1, 0
    %v443 = vsel %vm427, 1, 0
    %v444 = vsel %vm428, 1, 0
    %v445 = vsel %vm429, 1, 0
    %v446 = vsel %vm430, 1, 0
    %v447 = vsel %vm431, 1, 0
    %v448 = vsel %vm432, 1, 0
    %v449 = vsel %vm433, 1, 0
    %v450 = vsel %vm434, 1, 0
    %v451 = vsel %vm435, 1, 0
    %v452 = vsel %vm436, 1, 0
    %v453 = vsel %vm437, 1, 0
    %v454 = vsel %vm438, 1, 0
    %v455 = vsel %vm439, 1, 0
    %v456 = vsel %vm440, 1, 0
    %v457 = vsel %vm441, 1, 0
    %v458 = vcvt.s32.f32 %v442
    %v459 = vcvt.s32.f32 %v443
    %v460 = vcvt.s32.f32 %v444
    %v461 = vcvt.s32.f32 %v445
    %v462 = vcvt.s32.f32 %v446
    %v463 = vcvt.s32.f32 %v447
    %v464 = vcvt.s32.f32 %v448
    %v465 = vcvt.s32.f32 %v449
    %v466 = vcvt.s32.f32 %v450
    %v467 = vcvt.s32.f32 %v451
    %v468 = vcvt.s32.f32 %v452
    %v469 = vcvt.s32.f32 %v453
    %v470 = vcvt.s32.f32 %v454
    %v471 = vcvt.s32.f32 %v455
    %v472 = vcvt.s32.f32 %v456
    %v473 = vcvt.s32.f32 %v457
    %v474 = vsub.f32 1.0, %v458
    %v475 = vsub.f32 1.0, %v459
    %v476 = vsub.f32 1.0, %v460
    %v477 = vsub.f32 1.0, %v461
    %v478 = vsub.f32 1.0, %v462
    %v479 = vsub.f32 1.0, %v463
    %v480 = vsub.f32 1.0, %v464
    %v481 = vsub.f32 1.0, %v465
    %v482 = vsub.f32 1.0, %v466
    %v483 = vsub.f32 1.0, %v467
    %v484 = vsub.f32 1.0, %v468
    %v485 = vsub.f32 1.0, %v469
    %v486 = vsub.f32 1.0, %v470
    %v487 = vsub.f32 1.0, %v471
    %v488 = vsub.f32 1.0, %v472
    %v489 = vsub.f32 1.0, %v473
    %v490 = vadd.f32 %v378, %v474
    %v491 = vadd.f32 %v379, %v475
    %v492 = vadd.f32 %v380, %v476
    %v493 = vadd.f32 %v381, %v477
    %v494 = vadd.f32 %v382, %v478
    %v495 = vadd.f32 %v383, %v479
    %v496 = vadd.f32 %v384, %v480
    %v497 = vadd.f32 %v385, %v481
    %v498 = vadd.f32 %v386, %v482
    %v499 = vadd.f32 %v387, %v483
    %v500 = vadd.f32 %v388, %v484
    %v501 = vadd.f32 %v389, %v485
    %v502 = vadd.f32 %v390, %v486
    %v503 = vadd.f32 %v391, %v487
    %v504 = vadd.f32 %v392, %v488
    %v505 = vadd.f32 %v393, %v489
    %v506 = vrcp.pop %v490
    %v507 = vrcp.pop %v491
    %v508 = vrcp.pop %v492
    %v509 = vrcp.pop %v493
    %v510 = vrcp.pop %v494
    %v511 = vrcp.pop %v495
    %v512 = vrcp.pop %v496
    %v513 = vrcp.pop %v497
    %v514 = vrcp.pop %v498
    %v515 = vrcp.pop %v499
    %v516 = vrcp.pop %v500
    %v517 = vrcp.pop %v501
    %v518 = vrcp.pop %v502
    %v519 = vrcp.pop %v503
    %v520 = vrcp.pop %v504
    %v521 = vrcp.pop %v505
    %v522 = vmul.f32 %v490, %v506
    %v523 = vmul.f32 %v491, %v507
    %v524 = vmul.f32 %v492, %v508
    %v525 = vmul.f32 %v493, %v509
    %v526 = vmul.f32 %v494, %v510
    %v527 = vmul.f32 %v495, %v511
    %v528 = vmul.f32 %v496, %v512
    %v529 = vmul.f32 %v497, %v513
    %v530 = vmul.f32 %v498, %v514
    %v531 = vmul.f32 %v499, %v515
    %v532 = vmul.f32 %v500, %v516
    %v533 = vmul.f32 %v501, %v517
    %v534 = vmul.f32 %v502, %v518
    %v535 = vmul.f32 %v503, %v519
    %v536 = vmul.f32 %v504, %v520
    %v537 = vmul.f32 %v505, %v521
    %v538 = vsub.f32 2.0, %v522
    %v539 = vsub.f32 2.0, %v523
    %v540 = vsub.f32 2.0, %v524
    %v541 = vsub.f32 2.0, %v525
    %v542 = vsub.f32 2.0, %v526
    %v543 = vsub.f32 2.0, %v527
    %v544 = vsub.f32 2.0, %v528
    %v545 = vsub.f32 2.0, %v529
    %v546 = vsub.f32 2.0, %v530
    %v547 = vsub.f32 2.0, %v531
    %v548 = vsub.f32 2.0, %v532
    %v549 = vsub.f32 2.0, %v533
    %v550 = vsub.f32 2.0, %v534
    %v551 = vsub.f32 2.0, %v535
    %v552 = vsub.f32 2.0, %v536
    %v553 = vsub.f32 2.0, %v537
    %v554 = vmul.f32 %v506, %v538
    %v555 = vmul.f32 %v507, %v539
    %v556 = vmul.f32 %v508, %v540
    %v557 = vmul.f32 %v509, %v541
    %v558 = vmul.f32 %v510, %v542
    %v559 = vmul.f32 %v511, %v543
    %v560 = vmul.f32 %v512, %v544
    %v561 = vmul.f32 %v513, %v545
    %v562 = vmul.f32 %v514, %v546
    %v563 = vmul.f32 %v515, %v547
    %v564 = vmul.f32 %v516, %v548
    %v565 = vmul.f32 %v517, %v549
    %v566 = vmul.f32 %v518, %v550
    %v567 = vmul.f32 %v519, %v551
    %v568 = vmul.f32 %v520, %v552
    %v569 = vmul.f32 %v521, %v553
    %v570 = vmul.f32 %v554, %v554
    %v571 = vmul.f32 %v555, %v555
    %v572 = vmul.f32 %v556, %v556
    %v573 = vmul.f32 %v557, %v557
    %v574 = vmul.f32 %v558, %v558
    %v575 = vmul.f32 %v559, %v559
    %v576 = vmul.f32 %v560, %v560
    %v577 = vmul.f32 %v561, %v561
    %v578 = vmul.f32 %v562, %v562
    %v579 = vmul.f32 %v563, %v563
    %v580 = vmul.f32 %v564, %v564
    %v581 = vmul.f32 %v565, %v565
    %v582 = vmul.f32 %v566, %v566
    %v583 = vmul.f32 %v567, %v567
    %v584 = vmul.f32 %v568, %v568
    %v585 = vmul.f32 %v569, %v569
    %v586 = vmul.f32 %v570, %v554
    %v587 = vmul.f32 %v571, %v555
    %v588 = vmul.f32 %v572, %v556
    %v589 = vmul.f32 %v573, %v557
    %v590 = vmul.f32 %v574, %v558
    %v591 = vmul.f32 %v575, %v559
    %v592 = vmul.f32 %v576, %v560
    %v593 = vmul.f32 %v577, %v561
    %v594 = vmul.f32 %v578, %v562
    %v595 = vmul.f32 %v579, %v563
    %v596 = vmul.f32 %v580, %v564
    %v597 = vmul.f32 %v581, %v565
    %v598 = vmul.f32 %v582, %v566
    %v599 = vmul.f32 %v583, %v567
    %v600 = vmul.f32 %v584, %v568
    %v601 = vmul.f32 %v585, %v569
    %v602 = vmul.f32 %v586, %v586
    %v603 = vmul.f32 %v587, %v587
    %v604 = vmul.f32 %v588, %v588
    %v605 = vmul.f32 %v589, %v589
    %v606 = vmul.f32 %v590, %v590
    %v607 = vmul.f32 %v591, %v591
    %v608 = vmul.f32 %v592, %v592
    %v609 = vmul.f32 %v593, %v593
    %v610 = vmul.f32 %v594, %v594
    %v611 = vmul.f32 %v595, %v595
    %v612 = vmul.f32 %v596, %v596
    %v613 = vmul.f32 %v597, %v597
    %v614 = vmul.f32 %v598, %v598
    %v615 = vmul.f32 %v599, %v599
    %v616 = vmul.f32 %v600, %v600
    %v617 = vmul.f32 %v601, %v601
    %v618 = vsub.f32 %v602, %v586
    %v619 = vsub.f32 %v603, %v587
    %v620 = vsub.f32 %v604, %v588
    %v621 = vsub.f32 %v605, %v589
    %v622 = vsub.f32 %v606, %v590
    %v623 = vsub.f32 %v607, %v591
    %v624 = vsub.f32 %v608, %v592
    %v625 = vsub.f32 %v609, %v593
    %v626 = vsub.f32 %v610, %v594
    %v627 = vsub.f32 %v611, %v595
    %v628 = vsub.f32 %v612, %v596
    %v629 = vsub.f32 %v613, %v597
    %v630 = vsub.f32 %v614, %v598
    %v631 = vsub.f32 %v615, %v599
    %v632 = vsub.f32 %v616, %v600
    %v633 = vsub.f32 %v617, %v601
    %v634 = vmul.f32 %v618, 2.0
    %v635 = vmul.f32 %v619, 2.0
    %v636 = vmul.f32 %v620, 2.0
    %v637 = vmul.f32 %v621, 2.0
    %v638 = vmul.f32 %v622, 2.0
    %v639 = vmul.f32 %v623, 2.0
    %v640 = vmul.f32 %v624, 2.0
    %v641 = vmul.f32 %v625, 2.0
    %v642 = vmul.f32 %v626, 2.0
    %v643 = vmul.f32 %v627, 2.0
    %v644 = vmul.f32 %v628, 2.0
    %v645 = vmul.f32 %v629, 2.0
    %v646 = vmul.f32 %v630, 2.0
    %v647 = vmul.f32 %v631, 2.0
    %v648 = vmul.f32 %v632, 2.0
    %v649 = vmul.f32 %v633, 2.0
    %v650 = vmul.f32 %v634, %v458
    %v651 = vmul.f32 %v635, %v459
    %v652 = vmul.f32 %v636, %v460
    %v653 = vmul.f32 %v637, %v461
    %v654 = vmul.f32 %v638, %v462
    %v655 = vmul.f32 %v639, %v463
    %v656 = vmul.f32 %v640, %v464
    %v657 = vmul.f32 %v641, %v465
    %v658 = vmul.f32 %v642, %v466
    %v659 = vmul.f32 %v643, %v467
    %v660 = vmul.f32 %v644, %v468
    %v661 = vmul.f32 %v645, %v469
    %v662 = vmul.f32 %v646, %v470
    %v663 = vmul.f32 %v647, %v471
    %v664 = vmul.f32 %v648, %v472
    %v665 = vmul.f32 %v649, %v473
    %666 = vadd.xlane.f32.xlu0 %v650
    %v667 = vpop.xlane.xlu0 %666
    %668 = vadd.xlane.f32.xlu0 %v651
    %v669 = vpop.xlane.xlu0 %668
    %670 = vadd.xlane.f32.xlu0 %v652
    %v671 = vpop.xlane.xlu0 %670
    %672 = vadd.xlane.f32.xlu0 %v653
    %v673 = vpop.xlane.xlu0 %672
    %674 = vadd.xlane.f32.xlu0 %v654
    %v675 = vpop.xlane.xlu0 %674
    %676 = vadd.xlane.f32.xlu0 %v655
    %v677 = vpop.xlane.xlu0 %676
    %678 = vadd.xlane.f32.xlu0 %v656
    %v679 = vpop.xlane.xlu0 %678
    %680 = vadd.xlane.f32.xlu0 %v657
    %v681 = vpop.xlane.xlu0 %680
    %682 = vadd.xlane.f32.xlu0 %v658
    %v683 = vpop.xlane.xlu0 %682
    %684 = vadd.xlane.f32.xlu0 %v659
    %v685 = vpop.xlane.xlu0 %684
    %686 = vadd.xlane.f32.xlu0 %v660
    %v687 = vpop.xlane.xlu0 %686
    %688 = vadd.xlane.f32.xlu0 %v661
    %v689 = vpop.xlane.xlu0 %688
    %690 = vadd.xlane.f32.xlu0 %v662
    %v691 = vpop.xlane.xlu0 %690
    %692 = vadd.xlane.f32.xlu0 %v663
    %v693 = vpop.xlane.xlu0 %692
    %694 = vadd.xlane.f32.xlu0 %v664
    %v695 = vpop.xlane.xlu0 %694
    %696 = vadd.xlane.f32.xlu0 %v665
    %v697 = vpop.xlane.xlu0 %696
    %v698 = vmul.f32 %v667, 0.5
    %v699 = vmul.f32 %v669, 0.5
    %v700 = vmul.f32 %v671, 0.5
    %v701 = vmul.f32 %v673, 0.5
    %v702 = vmul.f32 %v675, 0.5
    %v703 = vmul.f32 %v677, 0.5
    %v704 = vmul.f32 %v679, 0.5
    %v705 = vmul.f32 %v681, 0.5
    %v706 = vmul.f32 %v683, 0.5
    %v707 = vmul.f32 %v685, 0.5
    %v708 = vmul.f32 %v687, 0.5
    %v709 = vmul.f32 %v689, 0.5
    %v710 = vmul.f32 %v691, 0.5
    %v711 = vmul.f32 %v693, 0.5
    %v712 = vmul.f32 %v695, 0.5
    %v713 = vmul.f32 %v697, 0.5
    %v714 = vmul.f32 %v586, 12.0
    %v715 = vmul.f32 %v587, 12.0
    %v716 = vmul.f32 %v588, 12.0
    %v717 = vmul.f32 %v589, 12.0
    %v718 = vmul.f32 %v590, 12.0
    %v719 = vmul.f32 %v591, 12.0
    %v720 = vmul.f32 %v592, 12.0
    %v721 = vmul.f32 %v593, 12.0
    %v722 = vmul.f32 %v594, 12.0
    %v723 = vmul.f32 %v595, 12.0
    %v724 = vmul.f32 %v596, 12.0
    %v725 = vmul.f32 %v597, 12.0
    %v726 = vmul.f32 %v598, 12.0
    %v727 = vmul.f32 %v599, 12.0
    %v728 = vmul.f32 %v600, 12.0
    %v729 = vmul.f32 %v601, 12.0
    %v730 = vmul.f32 %v602, 24.0
    %v731 = vmul.f32 %v603, 24.0
    %v732 = vmul.f32 %v604, 24.0
    %v733 = vmul.f32 %v605, 24.0
    %v734 = vmul.f32 %v606, 24.0
    %v735 = vmul.f32 %v607, 24.0
    %v736 = vmul.f32 %v608, 24.0
    %v737 = vmul.f32 %v609, 24.0
    %v738 = vmul.f32 %v610, 24.0
    %v739 = vmul.f32 %v611, 24.0
    %v740 = vmul.f32 %v612, 24.0
    %v741 = vmul.f32 %v613, 24.0
    %v742 = vmul.f32 %v614, 24.0
    %v743 = vmul.f32 %v615, 24.0
    %v744 = vmul.f32 %v616, 24.0
    %v745 = vmul.f32 %v617, 24.0
    %v746 = vsub.f32 %v714, %v730
    %v747 = vsub.f32 %v715, %v731
    %v748 = vsub.f32 %v716, %v732
    %v749 = vsub.f32 %v717, %v733
    %v750 = vsub.f32 %v718, %v734
    %v751 = vsub.f32 %v719, %v735
    %v752 = vsub.f32 %v720, %v736
    %v753 = vsub.f32 %v721, %v737
    %v754 = vsub.f32 %v722, %v738
    %v755 = vsub.f32 %v723, %v739
    %v756 = vsub.f32 %v724, %v740
    %v757 = vsub.f32 %v725, %v741
    %v758 = vsub.f32 %v726, %v742
    %v759 = vsub.f32 %v727, %v743
    %v760 = vsub.f32 %v728, %v744
    %v761 = vsub.f32 %v729, %v745
    %v762 = vmul.f32 %v746, %v554
    %v763 = vmul.f32 %v747, %v555
    %v764 = vmul.f32 %v748, %v556
    %v765 = vmul.f32 %v749, %v557
    %v766 = vmul.f32 %v750, %v558
    %v767 = vmul.f32 %v751, %v559
    %v768 = vmul.f32 %v752, %v560
    %v769 = vmul.f32 %v753, %v561
    %v770 = vmul.f32 %v754, %v562
    %v771 = vmul.f32 %v755, %v563
    %v772 = vmul.f32 %v756, %v564
    %v773 = vmul.f32 %v757, %v565
    %v774 = vmul.f32 %v758, %v566
    %v775 = vmul.f32 %v759, %v567
    %v776 = vmul.f32 %v760, %v568
    %v777 = vmul.f32 %v761, %v569
    %v778 = vmul.f32 %v762, %v458
    %v779 = vmul.f32 %v763, %v459
    %v780 = vmul.f32 %v764, %v460
    %v781 = vmul.f32 %v765, %v461
    %v782 = vmul.f32 %v766, %v462
    %v783 = vmul.f32 %v767, %v463
    %v784 = vmul.f32 %v768, %v464
    %v785 = vmul.f32 %v769, %v465
    %v786 = vmul.f32 %v770, %v466
    %v787 = vmul.f32 %v771, %v467
    %v788 = vmul.f32 %v772, %v468
    %v789 = vmul.f32 %v773, %v469
    %v790 = vmul.f32 %v774, %v470
    %v791 = vmul.f32 %v775, %v471
    %v792 = vmul.f32 %v776, %v472
    %v793 = vmul.f32 %v777, %v473
    %v794 = vld [vmem:[%s2] sm:$0xff]
    %v795 = vld [vmem:[%s2 + $0x8] sm:$0xff]
    %v796 = vld [vmem:[%s2 + $0x10] sm:$0xff]
    %v797 = vld [vmem:[%s2 + $0x18] sm:$0xff]
    %v798 = vld [vmem:[%s2 + $0x20] sm:$0xff]
    %v799 = vld [vmem:[%s2 + $0x28] sm:$0xff]
    %v800 = vld [vmem:[%s2 + $0x30] sm:$0xff]
    %v801 = vld [vmem:[%s2 + $0x38] sm:$0xff]
    %v802 = vld [vmem:[%s2 + $0x40] sm:$0xff]
    %v803 = vld [vmem:[%s2 + $0x48] sm:$0xff]
    %v804 = vld [vmem:[%s2 + $0x50] sm:$0xff]
    %v805 = vld [vmem:[%s2 + $0x58] sm:$0xff]
    %v806 = vld [vmem:[%s2 + $0x60] sm:$0xff]
    %v807 = vld [vmem:[%s2 + $0x68] sm:$0xff]
    %v808 = vld [vmem:[%s2 + $0x70] sm:$0xff]
    %v809 = vld [vmem:[%s2 + $0x78] sm:$0xff]
    %810 = vmatpush.msra.mxu0 %v809
    %811 = vmatpush.msra.mxu0 %v808
    %812 = vmatpush.msra.mxu0 %v807
    %813 = vmatpush.msra.mxu0 %v806
    %814 = vmatpush.msra.mxu0 %v805
    %815 = vmatpush.msra.mxu0 %v804
    %816 = vmatpush.msra.mxu0 %v803
    %817 = vmatpush.msra.mxu0 %v802
    %818 = vmatpush.msra.mxu0 %v801
    %819 = vmatpush.msra.mxu0 %v800
    %820 = vmatpush.msra.mxu0 %v799
    %821 = vmatpush.msra.mxu0 %v798
    %822 = vmatpush.msra.mxu0 %v797
    %823 = vmatpush.msra.mxu0 %v796
    %824 = vmatpush.msra.mxu0 %v795
    %825 = vmatpush.msra.mxu0 %v794
    %826 = vmatmul.f32.gmra.mxu0 %v778
    %v827 = vpop.f32.mrf.mxu0
    %v828 = vadd.f32 0.0, %v827
    %829 = vmatmul.f32.gmra.mxu0 %v779
    %v830 = vpop.f32.mrf.mxu0
    %v831 = vadd.f32 0.0, %v830
    %832 = vmatmul.f32.gmra.mxu0 %v780
    %v833 = vpop.f32.mrf.mxu0
    %v834 = vadd.f32 0.0, %v833
    %835 = vmatmul.f32.gmra.mxu0 %v781
    %v836 = vpop.f32.mrf.mxu0
    %v837 = vadd.f32 0.0, %v836
    %838 = vmatmul.f32.gmra.mxu0 %v782
    %v839 = vpop.f32.mrf.mxu0
    %v840 = vadd.f32 0.0, %v839
    %841 = vmatmul.f32.gmra.mxu0 %v783
    %v842 = vpop.f32.mrf.mxu0
    %v843 = vadd.f32 0.0, %v842
    %844 = vmatmul.f32.gmra.mxu0 %v784
    %v845 = vpop.f32.mrf.mxu0
    %v846 = vadd.f32 0.0, %v845
    %847 = vmatmul.f32.gmra.mxu0 %v785
    %v848 = vpop.f32.mrf.mxu0
    %v849 = vadd.f32 0.0, %v848
    %850 = vmatmul.f32.gmra.mxu0 %v786
    %v851 = vpop.f32.mrf.mxu0
    %v852 = vadd.f32 0.0, %v851
    %853 = vmatmul.f32.gmra.mxu0 %v787
    %v854 = vpop.f32.mrf.mxu0
    %v855 = vadd.f32 0.0, %v854
    %856 = vmatmul.f32.gmra.mxu0 %v788
    %v857 = vpop.f32.mrf.mxu0
    %v858 = vadd.f32 0.0, %v857
    %859 = vmatmul.f32.gmra.mxu0 %v789
    %v860 = vpop.f32.mrf.mxu0
    %v861 = vadd.f32 0.0, %v860
    %862 = vmatmul.f32.gmra.mxu0 %v790
    %v863 = vpop.f32.mrf.mxu0
    %v864 = vadd.f32 0.0, %v863
    %865 = vmatmul.f32.gmra.mxu0 %v791
    %v866 = vpop.f32.mrf.mxu0
    %v867 = vadd.f32 0.0, %v866
    %868 = vmatmul.f32.gmra.mxu0 %v792
    %v869 = vpop.f32.mrf.mxu0
    %v870 = vadd.f32 0.0, %v869
    %871 = vmatmul.f32.gmra.mxu0 %v793
    %v872 = vpop.f32.mrf.mxu0
    %v873 = vadd.f32 0.0, %v872
    %874 = vdwg.mxu0
    %v875 = vld [vmem:[#allocation2] sm:$0xff]
    %v876 = vld [vmem:[#allocation2 + $0x8] sm:$0xff]
    %v877 = vld [vmem:[#allocation2 + $0x10] sm:$0xff]
    %v878 = vld [vmem:[#allocation2 + $0x18] sm:$0xff]
    %v879 = vld [vmem:[#allocation2 + $0x20] sm:$0xff]
    %v880 = vld [vmem:[#allocation2 + $0x28] sm:$0xff]
    %v881 = vld [vmem:[#allocation2 + $0x30] sm:$0xff]
    %v882 = vld [vmem:[#allocation2 + $0x38] sm:$0xff]
    %v883 = vld [vmem:[#allocation2 + $0x40] sm:$0xff]
    %v884 = vld [vmem:[#allocation2 + $0x48] sm:$0xff]
    %v885 = vld [vmem:[#allocation2 + $0x50] sm:$0xff]
    %v886 = vld [vmem:[#allocation2 + $0x58] sm:$0xff]
    %v887 = vld [vmem:[#allocation2 + $0x60] sm:$0xff]
    %v888 = vld [vmem:[#allocation2 + $0x68] sm:$0xff]
    %v889 = vld [vmem:[#allocation2 + $0x70] sm:$0xff]
    %v890 = vld [vmem:[#allocation2 + $0x78] sm:$0xff]
    %v891 = vadd.f32 %v875, %v828
    %v892 = vadd.f32 %v876, %v831
    %v893 = vadd.f32 %v877, %v834
    %v894 = vadd.f32 %v878, %v837
    %v895 = vadd.f32 %v879, %v840
    %v896 = vadd.f32 %v880, %v843
    %v897 = vadd.f32 %v881, %v846
    %v898 = vadd.f32 %v882, %v849
    %v899 = vadd.f32 %v883, %v852
    %v900 = vadd.f32 %v884, %v855
    %v901 = vadd.f32 %v885, %v858
    %v902 = vadd.f32 %v886, %v861
    %v903 = vadd.f32 %v887, %v864
    %v904 = vadd.f32 %v888, %v867
    %v905 = vadd.f32 %v889, %v870
    %v906 = vadd.f32 %v890, %v873
    %vm907 = vcmask 130048
    %908 = vst.msk [vmem:[#allocation2] sm:$0xff] %vm907, %v891
    %909 = vst.msk [vmem:[#allocation2 + $0x8] sm:$0xff] %vm907, %v892
    %910 = vst.msk [vmem:[#allocation2 + $0x10] sm:$0xff] %vm907, %v893
    %911 = vst.msk [vmem:[#allocation2 + $0x18] sm:$0xff] %vm907, %v894
    %912 = vst.msk [vmem:[#allocation2 + $0x20] sm:$0xff] %vm907, %v895
    %913 = vst.msk [vmem:[#allocation2 + $0x28] sm:$0xff] %vm907, %v896
    %914 = vst.msk [vmem:[#allocation2 + $0x30] sm:$0xff] %vm907, %v897
    %915 = vst.msk [vmem:[#allocation2 + $0x38] sm:$0xff] %vm907, %v898
    %916 = vst.msk [vmem:[#allocation2 + $0x40] sm:$0xff] %vm907, %v899
    %917 = vst.msk [vmem:[#allocation2 + $0x48] sm:$0xff] %vm907, %v900
    %918 = vst.msk [vmem:[#allocation2 + $0x50] sm:$0xff] %vm907, %v901
    %919 = vst.msk [vmem:[#allocation2 + $0x58] sm:$0xff] %vm907, %v902
    %920 = vst.msk [vmem:[#allocation2 + $0x60] sm:$0xff] %vm907, %v903
    %921 = vst.msk [vmem:[#allocation2 + $0x68] sm:$0xff] %vm907, %v904
    %922 = vst.msk [vmem:[#allocation2 + $0x70] sm:$0xff] %vm907, %v905
    %923 = vst.msk [vmem:[#allocation2 + $0x78] sm:$0xff] %vm907, %v906
    %v924 = vld [vmem:[#allocation2] sm:$0xff]
    %v925 = vld [vmem:[#allocation2 + $0x8] sm:$0xff]
    %v926 = vld [vmem:[#allocation2 + $0x10] sm:$0xff]
    %v927 = vld [vmem:[#allocation2 + $0x18] sm:$0xff]
    %v928 = vld [vmem:[#allocation2 + $0x20] sm:$0xff]
    %v929 = vld [vmem:[#allocation2 + $0x28] sm:$0xff]
    %v930 = vld [vmem:[#allocation2 + $0x30] sm:$0xff]
    %v931 = vld [vmem:[#allocation2 + $0x38] sm:$0xff]
    %v932 = vld [vmem:[#allocation2 + $0x40] sm:$0xff]
    %v933 = vld [vmem:[#allocation2 + $0x48] sm:$0xff]
    %v934 = vld [vmem:[#allocation2 + $0x50] sm:$0xff]
    %v935 = vld [vmem:[#allocation2 + $0x58] sm:$0xff]
    %v936 = vld [vmem:[#allocation2 + $0x60] sm:$0xff]
    %v937 = vld [vmem:[#allocation2 + $0x68] sm:$0xff]
    %v938 = vld [vmem:[#allocation2 + $0x70] sm:$0xff]
    %v939 = vld [vmem:[#allocation2 + $0x78] sm:$0xff]
    %v940 = vadd.f32 %v924, %v698
    %v941 = vadd.f32 %v925, %v699
    %v942 = vadd.f32 %v926, %v700
    %v943 = vadd.f32 %v927, %v701
    %v944 = vadd.f32 %v928, %v702
    %v945 = vadd.f32 %v929, %v703
    %v946 = vadd.f32 %v930, %v704
    %v947 = vadd.f32 %v931, %v705
    %v948 = vadd.f32 %v932, %v706
    %v949 = vadd.f32 %v933, %v707
    %v950 = vadd.f32 %v934, %v708
    %v951 = vadd.f32 %v935, %v709
    %v952 = vadd.f32 %v936, %v710
    %v953 = vadd.f32 %v937, %v711
    %v954 = vadd.f32 %v938, %v712
    %v955 = vadd.f32 %v939, %v713
    %vm956 = vcmask 113768
    %957 = vst.msk [vmem:[#allocation2] sm:$0xff] %vm956, %v940
    %958 = vst.msk [vmem:[#allocation2 + $0x8] sm:$0xff] %vm956, %v941
    %959 = vst.msk [vmem:[#allocation2 + $0x10] sm:$0xff] %vm956, %v942
    %960 = vst.msk [vmem:[#allocation2 + $0x18] sm:$0xff] %vm956, %v943
    %961 = vst.msk [vmem:[#allocation2 + $0x20] sm:$0xff] %vm956, %v944
    %962 = vst.msk [vmem:[#allocation2 + $0x28] sm:$0xff] %vm956, %v945
    %963 = vst.msk [vmem:[#allocation2 + $0x30] sm:$0xff] %vm956, %v946
    %964 = vst.msk [vmem:[#allocation2 + $0x38] sm:$0xff] %vm956, %v947
    %965 = vst.msk [vmem:[#allocation2 + $0x40] sm:$0xff] %vm956, %v948
    %966 = vst.msk [vmem:[#allocation2 + $0x48] sm:$0xff] %vm956, %v949
    %967 = vst.msk [vmem:[#allocation2 + $0x50] sm:$0xff] %vm956, %v950
    %968 = vst.msk [vmem:[#allocation2 + $0x58] sm:$0xff] %vm956, %v951
    %969 = vst.msk [vmem:[#allocation2 + $0x60] sm:$0xff] %vm956, %v952
    %970 = vst.msk [vmem:[#allocation2 + $0x68] sm:$0xff] %vm956, %v953
    %971 = vst.msk [vmem:[#allocation2 + $0x70] sm:$0xff] %vm956, %v954
    %972 = vst.msk [vmem:[#allocation2 + $0x78] sm:$0xff] %vm956, %v955
    // Predicated region
    $region18: #{tpu_custom_call.1} parent=1 // pred_check
      %p973 = pneg %p15
    $region19: #{tpu_custom_call.1} parent=1 // pred_check_branch
      %975 = sbr.rel (%p973) target = $region21
    $region20: #{tpu_custom_call.1} parent=1 // pred_region
      %v976 = vld [vmem:[#allocation2] sm:$0xff]
      %v977 = vld [vmem:[#allocation2 + $0x8] sm:$0xff]
      %v978 = vld [vmem:[#allocation2 + $0x10] sm:$0xff]
      %v979 = vld [vmem:[#allocation2 + $0x18] sm:$0xff]
      %v980 = vld [vmem:[#allocation2 + $0x20] sm:$0xff]
      %v981 = vld [vmem:[#allocation2 + $0x28] sm:$0xff]
      %v982 = vld [vmem:[#allocation2 + $0x30] sm:$0xff]
      %v983 = vld [vmem:[#allocation2 + $0x38] sm:$0xff]
      %v984 = vld [vmem:[#allocation2 + $0x40] sm:$0xff]
      %v985 = vld [vmem:[#allocation2 + $0x48] sm:$0xff]
      %v986 = vld [vmem:[#allocation2 + $0x50] sm:$0xff]
      %v987 = vld [vmem:[#allocation2 + $0x58] sm:$0xff]
      %v988 = vld [vmem:[#allocation2 + $0x60] sm:$0xff]
      %v989 = vld [vmem:[#allocation2 + $0x68] sm:$0xff]
      %v990 = vld [vmem:[#allocation2 + $0x70] sm:$0xff]
      %v991 = vld [vmem:[#allocation2 + $0x78] sm:$0xff]
      %v992 = vld [vmem:[%s0] sm:$0xff]
      %v993 = vld [vmem:[%s0 + $0x8] sm:$0xff]
      %v994 = vld [vmem:[%s0 + $0x10] sm:$0xff]
      %v995 = vld [vmem:[%s0 + $0x18] sm:$0xff]
      %v996 = vld [vmem:[%s0 + $0x20] sm:$0xff]
      %v997 = vld [vmem:[%s0 + $0x28] sm:$0xff]
      %v998 = vld [vmem:[%s0 + $0x30] sm:$0xff]
      %v999 = vld [vmem:[%s0 + $0x38] sm:$0xff]
      %v1000 = vld [vmem:[%s0 + $0x40] sm:$0xff]
      %v1001 = vld [vmem:[%s0 + $0x48] sm:$0xff]
      %v1002 = vld [vmem:[%s0 + $0x50] sm:$0xff]
      %v1003 = vld [vmem:[%s0 + $0x58] sm:$0xff]
      %v1004 = vld [vmem:[%s0 + $0x60] sm:$0xff]
      %v1005 = vld [vmem:[%s0 + $0x68] sm:$0xff]
      %v1006 = vld [vmem:[%s0 + $0x70] sm:$0xff]
      %v1007 = vld [vmem:[%s0 + $0x78] sm:$0xff]
      %1009 = vset.pattern.permute.xlu0 0
      %1010 = vperm.xlu0 %1009, %v976
      %v1011 = vpop.permute.xlu0 %1010
      %1014 = vset.pattern.permute.xlu0 0
      %1015 = vperm.xlu0 %1014, %v977
      %v1016 = vpop.permute.xlu0 %1015
      %1019 = vset.pattern.permute.xlu0 0
      %1020 = vperm.xlu0 %1019, %v978
      %v1021 = vpop.permute.xlu0 %1020
      %1024 = vset.pattern.permute.xlu0 0
      %1025 = vperm.xlu0 %1024, %v979
      %v1026 = vpop.permute.xlu0 %1025
      %1029 = vset.pattern.permute.xlu0 0
      %1030 = vperm.xlu0 %1029, %v980
      %v1031 = vpop.permute.xlu0 %1030
      %1034 = vset.pattern.permute.xlu0 0
      %1035 = vperm.xlu0 %1034, %v981
      %v1036 = vpop.permute.xlu0 %1035
      %1039 = vset.pattern.permute.xlu0 0
      %1040 = vperm.xlu0 %1039, %v982
      %v1041 = vpop.permute.xlu0 %1040
      %1044 = vset.pattern.permute.xlu0 0
      %1045 = vperm.xlu0 %1044, %v983
      %v1046 = vpop.permute.xlu0 %1045
      %1049 = vset.pattern.permute.xlu0 0
      %1050 = vperm.xlu0 %1049, %v984
      %v1051 = vpop.permute.xlu0 %1050
      %1054 = vset.pattern.permute.xlu0 0
      %1055 = vperm.xlu0 %1054, %v985
      %v1056 = vpop.permute.xlu0 %1055
      %1059 = vset.pattern.permute.xlu0 0
      %1060 = vperm.xlu0 %1059, %v986
      %v1061 = vpop.permute.xlu0 %1060
      %1064 = vset.pattern.permute.xlu0 0
      %1065 = vperm.xlu0 %1064, %v987
      %v1066 = vpop.permute.xlu0 %1065
      %1069 = vset.pattern.permute.xlu0 0
      %1070 = vperm.xlu0 %1069, %v988
      %v1071 = vpop.permute.xlu0 %1070
      %1074 = vset.pattern.permute.xlu0 0
      %1075 = vperm.xlu0 %1074, %v989
      %v1076 = vpop.permute.xlu0 %1075
      %1079 = vset.pattern.permute.xlu0 0
      %1080 = vperm.xlu0 %1079, %v990
      %v1081 = vpop.permute.xlu0 %1080
      %1084 = vset.pattern.permute.xlu0 0
      %1085 = vperm.xlu0 %1084, %v991
      %v1086 = vpop.permute.xlu0 %1085
      %v1088 = vmul.f32 %v992, %v1011
      %v1089 = vmul.f32 %v993, %v1016
      %v1090 = vmul.f32 %v994, %v1021
      %v1091 = vmul.f32 %v995, %v1026
      %v1092 = vmul.f32 %v996, %v1031
      %v1093 = vmul.f32 %v997, %v1036
      %v1094 = vmul.f32 %v998, %v1041
      %v1095 = vmul.f32 %v999, %v1046
      %v1096 = vmul.f32 %v1000, %v1051
      %v1097 = vmul.f32 %v1001, %v1056
      %v1098 = vmul.f32 %v1002, %v1061
      %v1099 = vmul.f32 %v1003, %v1066
      %v1100 = vmul.f32 %v1004, %v1071
      %v1101 = vmul.f32 %v1005, %v1076
      %v1102 = vmul.f32 %v1006, %v1081
      %v1103 = vmul.f32 %v1007, %v1086
      %1120 = vrot.lane.b32.xlu0 %v1088, 1
      %v1121 = vpop.permute.xlu0 %1120
      %1122 = vrot.lane.b32.xlu0 %v1089, 1
      %v1123 = vpop.permute.xlu0 %1122
      %1124 = vrot.lane.b32.xlu0 %v1090, 1
      %v1125 = vpop.permute.xlu0 %1124
      %1126 = vrot.lane.b32.xlu0 %v1091, 1
      %v1127 = vpop.permute.xlu0 %1126
      %1128 = vrot.lane.b32.xlu0 %v1092, 1
      %v1129 = vpop.permute.xlu0 %1128
      %1130 = vrot.lane.b32.xlu0 %v1093, 1
      %v1131 = vpop.permute.xlu0 %1130
      %1132 = vrot.lane.b32.xlu0 %v1094, 1
      %v1133 = vpop.permute.xlu0 %1132
      %1134 = vrot.lane.b32.xlu0 %v1095, 1
      %v1135 = vpop.permute.xlu0 %1134
      %1136 = vrot.lane.b32.xlu0 %v1096, 1
      %v1137 = vpop.permute.xlu0 %1136
      %1138 = vrot.lane.b32.xlu0 %v1097, 1
      %v1139 = vpop.permute.xlu0 %1138
      %1140 = vrot.lane.b32.xlu0 %v1098, 1
      %v1141 = vpop.permute.xlu0 %1140
      %1142 = vrot.lane.b32.xlu0 %v1099, 1
      %v1143 = vpop.permute.xlu0 %1142
      %1144 = vrot.lane.b32.xlu0 %v1100, 1
      %v1145 = vpop.permute.xlu0 %1144
      %1146 = vrot.lane.b32.xlu0 %v1101, 1
      %v1147 = vpop.permute.xlu0 %1146
      %1148 = vrot.lane.b32.xlu0 %v1102, 1
      %v1149 = vpop.permute.xlu0 %1148
      %1150 = vrot.lane.b32.xlu0 %v1103, 1
      %v1151 = vpop.permute.xlu0 %1150
      %v1168 = vsub.f32 %v976, %v1121
      %v1169 = vsub.f32 %v977, %v1123
      %v1170 = vsub.f32 %v978, %v1125
      %v1171 = vsub.f32 %v979, %v1127
      %v1172 = vsub.f32 %v980, %v1129
      %v1173 = vsub.f32 %v981, %v1131
      %v1174 = vsub.f32 %v982, %v1133
      %v1175 = vsub.f32 %v983, %v1135
      %v1176 = vsub.f32 %v984, %v1137
      %v1177 = vsub.f32 %v985, %v1139
      %v1178 = vsub.f32 %v986, %v1141
      %v1179 = vsub.f32 %v987, %v1143
      %v1180 = vsub.f32 %v988, %v1145
      %v1181 = vsub.f32 %v989, %v1147
      %v1182 = vsub.f32 %v990, %v1149
      %v1183 = vsub.f32 %v991, %v1151
      %v1184 = vmul.f32 %v59, %v976
      %v1185 = vmul.f32 %v64, %v977
      %v1186 = vmul.f32 %v69, %v978
      %v1187 = vmul.f32 %v74, %v979
      %v1188 = vmul.f32 %v79, %v980
      %v1189 = vmul.f32 %v84, %v981
      %v1190 = vmul.f32 %v89, %v982
      %v1191 = vmul.f32 %v94, %v983
      %v1192 = vmul.f32 %v99, %v984
      %v1193 = vmul.f32 %v104, %v985
      %v1194 = vmul.f32 %v109, %v986
      %v1195 = vmul.f32 %v114, %v987
      %v1196 = vmul.f32 %v119, %v988
      %v1197 = vmul.f32 %v124, %v989
      %v1198 = vmul.f32 %v129, %v990
      %v1199 = vmul.f32 %v134, %v991
      %1216 = vrot.lane.b32.xlu0 %v1184, 3
      %v1217 = vpop.permute.xlu0 %1216
      %1218 = vrot.lane.b32.xlu0 %v1185, 3
      %v1219 = vpop.permute.xlu0 %1218
      %1220 = vrot.lane.b32.xlu0 %v1186, 3
      %v1221 = vpop.permute.xlu0 %1220
      %1222 = vrot.lane.b32.xlu0 %v1187, 3
      %v1223 = vpop.permute.xlu0 %1222
      %1224 = vrot.lane.b32.xlu0 %v1188, 3
      %v1225 = vpop.permute.xlu0 %1224
      %1226 = vrot.lane.b32.xlu0 %v1189, 3
      %v1227 = vpop.permute.xlu0 %1226
      %1228 = vrot.lane.b32.xlu0 %v1190, 3
      %v1229 = vpop.permute.xlu0 %1228
      %1230 = vrot.lane.b32.xlu0 %v1191, 3
      %v1231 = vpop.permute.xlu0 %1230
      %1232 = vrot.lane.b32.xlu0 %v1192, 3
      %v1233 = vpop.permute.xlu0 %1232
      %1234 = vrot.lane.b32.xlu0 %v1193, 3
      %v1235 = vpop.permute.xlu0 %1234
      %1236 = vrot.lane.b32.xlu0 %v1194, 3
      %v1237 = vpop.permute.xlu0 %1236
      %1238 = vrot.lane.b32.xlu0 %v1195, 3
      %v1239 = vpop.permute.xlu0 %1238
      %1240 = vrot.lane.b32.xlu0 %v1196, 3
      %v1241 = vpop.permute.xlu0 %1240
      %1242 = vrot.lane.b32.xlu0 %v1197, 3
      %v1243 = vpop.permute.xlu0 %1242
      %1244 = vrot.lane.b32.xlu0 %v1198, 3
      %v1245 = vpop.permute.xlu0 %1244
      %1246 = vrot.lane.b32.xlu0 %v1199, 3
      %v1247 = vpop.permute.xlu0 %1246
      %v1264 = vsub.f32 %v976, %v1217
      %v1265 = vsub.f32 %v977, %v1219
      %v1266 = vsub.f32 %v978, %v1221
      %v1267 = vsub.f32 %v979, %v1223
      %v1268 = vsub.f32 %v980, %v1225
      %v1269 = vsub.f32 %v981, %v1227
      %v1270 = vsub.f32 %v982, %v1229
      %v1271 = vsub.f32 %v983, %v1231
      %v1272 = vsub.f32 %v984, %v1233
      %v1273 = vsub.f32 %v985, %v1235
      %v1274 = vsub.f32 %v986, %v1237
      %v1275 = vsub.f32 %v987, %v1239
      %v1276 = vsub.f32 %v988, %v1241
      %v1277 = vsub.f32 %v989, %v1243
      %v1278 = vsub.f32 %v990, %v1245
      %v1279 = vsub.f32 %v991, %v1247
      %1280 = vset.pattern.permute.xlu0 1
      %1281 = vperm.xlu0 %1280, %v976
      %v1282 = vpop.permute.xlu0 %1281
      %1284 = vset.pattern.permute.xlu0 1
      %1285 = vperm.xlu0 %1284, %v977
      %v1286 = vpop.permute.xlu0 %1285
      %1288 = vset.pattern.permute.xlu0 1
      %1289 = vperm.xlu0 %1288, %v978
      %v1290 = vpop.permute.xlu0 %1289
      %1292 = vset.pattern.permute.xlu0 1
      %1293 = vperm.xlu0 %1292, %v979
      %v1294 = vpop.permute.xlu0 %1293
      %1296 = vset.pattern.permute.xlu0 1
      %1297 = vperm.xlu0 %1296, %v980
      %v1298 = vpop.permute.xlu0 %1297
      %1300 = vset.pattern.permute.xlu0 1
      %1301 = vperm.xlu0 %1300, %v981
      %v1302 = vpop.permute.xlu0 %1301
      %1304 = vset.pattern.permute.xlu0 1
      %1305 = vperm.xlu0 %1304, %v982
      %v1306 = vpop.permute.xlu0 %1305
      %1308 = vset.pattern.permute.xlu0 1
      %1309 = vperm.xlu0 %1308, %v983
      %v1310 = vpop.permute.xlu0 %1309
      %1312 = vset.pattern.permute.xlu0 1
      %1313 = vperm.xlu0 %1312, %v984
      %v1314 = vpop.permute.xlu0 %1313
      %1316 = vset.pattern.permute.xlu0 1
      %1317 = vperm.xlu0 %1316, %v985
      %v1318 = vpop.permute.xlu0 %1317
      %1320 = vset.pattern.permute.xlu0 1
      %1321 = vperm.xlu0 %1320, %v986
      %v1322 = vpop.permute.xlu0 %1321
      %1324 = vset.pattern.permute.xlu0 1
      %1325 = vperm.xlu0 %1324, %v987
      %v1326 = vpop.permute.xlu0 %1325
      %1328 = vset.pattern.permute.xlu0 1
      %1329 = vperm.xlu0 %1328, %v988
      %v1330 = vpop.permute.xlu0 %1329
      %1332 = vset.pattern.permute.xlu0 1
      %1333 = vperm.xlu0 %1332, %v989
      %v1334 = vpop.permute.xlu0 %1333
      %1336 = vset.pattern.permute.xlu0 1
      %1337 = vperm.xlu0 %1336, %v990
      %v1338 = vpop.permute.xlu0 %1337
      %1340 = vset.pattern.permute.xlu0 1
      %1341 = vperm.xlu0 %1340, %v991
      %v1342 = vpop.permute.xlu0 %1341
      %v1344 = vmul.f32 %v992, %v1282
      %v1345 = vmul.f32 %v993, %v1286
      %v1346 = vmul.f32 %v994, %v1290
      %v1347 = vmul.f32 %v995, %v1294
      %v1348 = vmul.f32 %v996, %v1298
      %v1349 = vmul.f32 %v997, %v1302
      %v1350 = vmul.f32 %v998, %v1306
      %v1351 = vmul.f32 %v999, %v1310
      %v1352 = vmul.f32 %v1000, %v1314
      %v1353 = vmul.f32 %v1001, %v1318
      %v1354 = vmul.f32 %v1002, %v1322
      %v1355 = vmul.f32 %v1003, %v1326
      %v1356 = vmul.f32 %v1004, %v1330
      %v1357 = vmul.f32 %v1005, %v1334
      %v1358 = vmul.f32 %v1006, %v1338
      %v1359 = vmul.f32 %v1007, %v1342
      %1376 = vrot.lane.b32.xlu0 %v1344, 4
      %v1377 = vpop.permute.xlu0 %1376
      %1378 = vrot.lane.b32.xlu0 %v1345, 4
      %v1379 = vpop.permute.xlu0 %1378
      %1380 = vrot.lane.b32.xlu0 %v1346, 4
      %v1381 = vpop.permute.xlu0 %1380
      %1382 = vrot.lane.b32.xlu0 %v1347, 4
      %v1383 = vpop.permute.xlu0 %1382
      %1384 = vrot.lane.b32.xlu0 %v1348, 4
      %v1385 = vpop.permute.xlu0 %1384
      %1386 = vrot.lane.b32.xlu0 %v1349, 4
      %v1387 = vpop.permute.xlu0 %1386
      %1388 = vrot.lane.b32.xlu0 %v1350, 4
      %v1389 = vpop.permute.xlu0 %1388
      %1390 = vrot.lane.b32.xlu0 %v1351, 4
      %v1391 = vpop.permute.xlu0 %1390
      %1392 = vrot.lane.b32.xlu0 %v1352, 4
      %v1393 = vpop.permute.xlu0 %1392
      %1394 = vrot.lane.b32.xlu0 %v1353, 4
      %v1395 = vpop.permute.xlu0 %1394
      %1396 = vrot.lane.b32.xlu0 %v1354, 4
      %v1397 = vpop.permute.xlu0 %1396
      %1398 = vrot.lane.b32.xlu0 %v1355, 4
      %v1399 = vpop.permute.xlu0 %1398
      %1400 = vrot.lane.b32.xlu0 %v1356, 4
      %v1401 = vpop.permute.xlu0 %1400
      %1402 = vrot.lane.b32.xlu0 %v1357, 4
      %v1403 = vpop.permute.xlu0 %1402
      %1404 = vrot.lane.b32.xlu0 %v1358, 4
      %v1405 = vpop.permute.xlu0 %1404
      %1406 = vrot.lane.b32.xlu0 %v1359, 4
      %v1407 = vpop.permute.xlu0 %1406
      %v1424 = vsub.f32 %v1264, %v1377
      %v1425 = vsub.f32 %v1265, %v1379
      %v1426 = vsub.f32 %v1266, %v1381
      %v1427 = vsub.f32 %v1267, %v1383
      %v1428 = vsub.f32 %v1268, %v1385
      %v1429 = vsub.f32 %v1269, %v1387
      %v1430 = vsub.f32 %v1270, %v1389
      %v1431 = vsub.f32 %v1271, %v1391
      %v1432 = vsub.f32 %v1272, %v1393
      %v1433 = vsub.f32 %v1273, %v1395
      %v1434 = vsub.f32 %v1274, %v1397
      %v1435 = vsub.f32 %v1275, %v1399
      %v1436 = vsub.f32 %v1276, %v1401
      %v1437 = vsub.f32 %v1277, %v1403
      %v1438 = vsub.f32 %v1278, %v1405
      %v1439 = vsub.f32 %v1279, %v1407
      %v1440 = vmul.f32 %v59, %v992
      %v1441 = vmul.f32 %v64, %v993
      %v1442 = vmul.f32 %v69, %v994
      %v1443 = vmul.f32 %v74, %v995
      %v1444 = vmul.f32 %v79, %v996
      %v1445 = vmul.f32 %v84, %v997
      %v1446 = vmul.f32 %v89, %v998
      %v1447 = vmul.f32 %v94, %v999
      %v1448 = vmul.f32 %v99, %v1000
      %v1449 = vmul.f32 %v104, %v1001
      %v1450 = vmul.f32 %v109, %v1002
      %v1451 = vmul.f32 %v114, %v1003
      %v1452 = vmul.f32 %v119, %v1004
      %v1453 = vmul.f32 %v124, %v1005
      %v1454 = vmul.f32 %v129, %v1006
      %v1455 = vmul.f32 %v134, %v1007
      %v1456 = vmul.f32 %v1440, %v1011
      %v1457 = vmul.f32 %v1441, %v1016
      %v1458 = vmul.f32 %v1442, %v1021
      %v1459 = vmul.f32 %v1443, %v1026
      %v1460 = vmul.f32 %v1444, %v1031
      %v1461 = vmul.f32 %v1445, %v1036
      %v1462 = vmul.f32 %v1446, %v1041
      %v1463 = vmul.f32 %v1447, %v1046
      %v1464 = vmul.f32 %v1448, %v1051
      %v1465 = vmul.f32 %v1449, %v1056
      %v1466 = vmul.f32 %v1450, %v1061
      %v1467 = vmul.f32 %v1451, %v1066
      %v1468 = vmul.f32 %v1452, %v1071
      %v1469 = vmul.f32 %v1453, %v1076
      %v1470 = vmul.f32 %v1454, %v1081
      %v1471 = vmul.f32 %v1455, %v1086
      %1488 = vrot.lane.b32.xlu0 %v1456, 4
      %v1489 = vpop.permute.xlu0 %1488
      %1490 = vrot.lane.b32.xlu0 %v1457, 4
      %v1491 = vpop.permute.xlu0 %1490
      %1492 = vrot.lane.b32.xlu0 %v1458, 4
      %v1493 = vpop.permute.xlu0 %1492
      %1494 = vrot.lane.b32.xlu0 %v1459, 4
      %v1495 = vpop.permute.xlu0 %1494
      %1496 = vrot.lane.b32.xlu0 %v1460, 4
      %v1497 = vpop.permute.xlu0 %1496
      %1498 = vrot.lane.b32.xlu0 %v1461, 4
      %v1499 = vpop.permute.xlu0 %1498
      %1500 = vrot.lane.b32.xlu0 %v1462, 4
      %v1501 = vpop.permute.xlu0 %1500
      %1502 = vrot.lane.b32.xlu0 %v1463, 4
      %v1503 = vpop.permute.xlu0 %1502
      %1504 = vrot.lane.b32.xlu0 %v1464, 4
      %v1505 = vpop.permute.xlu0 %1504
      %1506 = vrot.lane.b32.xlu0 %v1465, 4
      %v1507 = vpop.permute.xlu0 %1506
      %1508 = vrot.lane.b32.xlu0 %v1466, 4
      %v1509 = vpop.permute.xlu0 %1508
      %1510 = vrot.lane.b32.xlu0 %v1467, 4
      %v1511 = vpop.permute.xlu0 %1510
      %1512 = vrot.lane.b32.xlu0 %v1468, 4
      %v1513 = vpop.permute.xlu0 %1512
      %1514 = vrot.lane.b32.xlu0 %v1469, 4
      %v1515 = vpop.permute.xlu0 %1514
      %1516 = vrot.lane.b32.xlu0 %v1470, 4
      %v1517 = vpop.permute.xlu0 %1516
      %1518 = vrot.lane.b32.xlu0 %v1471, 4
      %v1519 = vpop.permute.xlu0 %1518
      %v1536 = vadd.f32 %v1424, %v1489
      %v1537 = vadd.f32 %v1425, %v1491
      %v1538 = vadd.f32 %v1426, %v1493
      %v1539 = vadd.f32 %v1427, %v1495
      %v1540 = vadd.f32 %v1428, %v1497
      %v1541 = vadd.f32 %v1429, %v1499
      %v1542 = vadd.f32 %v1430, %v1501
      %v1543 = vadd.f32 %v1431, %v1503
      %v1544 = vadd.f32 %v1432, %v1505
      %v1545 = vadd.f32 %v1433, %v1507
      %v1546 = vadd.f32 %v1434, %v1509
      %v1547 = vadd.f32 %v1435, %v1511
      %v1548 = vadd.f32 %v1436, %v1513
      %v1549 = vadd.f32 %v1437, %v1515
      %v1550 = vadd.f32 %v1438, %v1517
      %v1551 = vadd.f32 %v1439, %v1519
      %v1552 = vmul.f32 %v155, %v976
      %v1553 = vmul.f32 %v159, %v977
      %v1554 = vmul.f32 %v163, %v978
      %v1555 = vmul.f32 %v167, %v979
      %v1556 = vmul.f32 %v171, %v980
      %v1557 = vmul.f32 %v175, %v981
      %v1558 = vmul.f32 %v179, %v982
      %v1559 = vmul.f32 %v183, %v983
      %v1560 = vmul.f32 %v187, %v984
      %v1561 = vmul.f32 %v191, %v985
      %v1562 = vmul.f32 %v195, %v986
      %v1563 = vmul.f32 %v199, %v987
      %v1564 = vmul.f32 %v203, %v988
      %v1565 = vmul.f32 %v207, %v989
      %v1566 = vmul.f32 %v211, %v990
      %v1567 = vmul.f32 %v215, %v991
      %1584 = vrot.lane.b32.xlu0 %v1552, 6
      %v1585 = vpop.permute.xlu0 %1584
      %1586 = vrot.lane.b32.xlu0 %v1553, 6
      %v1587 = vpop.permute.xlu0 %1586
      %1588 = vrot.lane.b32.xlu0 %v1554, 6
      %v1589 = vpop.permute.xlu0 %1588
      %1590 = vrot.lane.b32.xlu0 %v1555, 6
      %v1591 = vpop.permute.xlu0 %1590
      %1592 = vrot.lane.b32.xlu0 %v1556, 6
      %v1593 = vpop.permute.xlu0 %1592
      %1594 = vrot.lane.b32.xlu0 %v1557, 6
      %v1595 = vpop.permute.xlu0 %1594
      %1596 = vrot.lane.b32.xlu0 %v1558, 6
      %v1597 = vpop.permute.xlu0 %1596
      %1598 = vrot.lane.b32.xlu0 %v1559, 6
      %v1599 = vpop.permute.xlu0 %1598
      %1600 = vrot.lane.b32.xlu0 %v1560, 6
      %v1601 = vpop.permute.xlu0 %1600
      %1602 = vrot.lane.b32.xlu0 %v1561, 6
      %v1603 = vpop.permute.xlu0 %1602
      %1604 = vrot.lane.b32.xlu0 %v1562, 6
      %v1605 = vpop.permute.xlu0 %1604
      %1606 = vrot.lane.b32.xlu0 %v1563, 6
      %v1607 = vpop.permute.xlu0 %1606
      %1608 = vrot.lane.b32.xlu0 %v1564, 6
      %v1609 = vpop.permute.xlu0 %1608
      %1610 = vrot.lane.b32.xlu0 %v1565, 6
      %v1611 = vpop.permute.xlu0 %1610
      %1612 = vrot.lane.b32.xlu0 %v1566, 6
      %v1613 = vpop.permute.xlu0 %1612
      %1614 = vrot.lane.b32.xlu0 %v1567, 6
      %v1615 = vpop.permute.xlu0 %1614
      %v1632 = vsub.f32 %v976, %v1585
      %v1633 = vsub.f32 %v977, %v1587
      %v1634 = vsub.f32 %v978, %v1589
      %v1635 = vsub.f32 %v979, %v1591
      %v1636 = vsub.f32 %v980, %v1593
      %v1637 = vsub.f32 %v981, %v1595
      %v1638 = vsub.f32 %v982, %v1597
      %v1639 = vsub.f32 %v983, %v1599
      %v1640 = vsub.f32 %v984, %v1601
      %v1641 = vsub.f32 %v985, %v1603
      %v1642 = vsub.f32 %v986, %v1605
      %v1643 = vsub.f32 %v987, %v1607
      %v1644 = vsub.f32 %v988, %v1609
      %v1645 = vsub.f32 %v989, %v1611
      %v1646 = vsub.f32 %v990, %v1613
      %v1647 = vsub.f32 %v991, %v1615
      %1648 = vset.pattern.permute.xlu0 2
      %1649 = vperm.xlu0 %1648, %v976
      %v1650 = vpop.permute.xlu0 %1649
      %1652 = vset.pattern.permute.xlu0 2
      %1653 = vperm.xlu0 %1652, %v977
      %v1654 = vpop.permute.xlu0 %1653
      %1656 = vset.pattern.permute.xlu0 2
      %1657 = vperm.xlu0 %1656, %v978
      %v1658 = vpop.permute.xlu0 %1657
      %1660 = vset.pattern.permute.xlu0 2
      %1661 = vperm.xlu0 %1660, %v979
      %v1662 = vpop.permute.xlu0 %1661
      %1664 = vset.pattern.permute.xlu0 2
      %1665 = vperm.xlu0 %1664, %v980
      %v1666 = vpop.permute.xlu0 %1665
      %1668 = vset.pattern.permute.xlu0 2
      %1669 = vperm.xlu0 %1668, %v981
      %v1670 = vpop.permute.xlu0 %1669
      %1672 = vset.pattern.permute.xlu0 2
      %1673 = vperm.xlu0 %1672, %v982
      %v1674 = vpop.permute.xlu0 %1673
      %1676 = vset.pattern.permute.xlu0 2
      %1677 = vperm.xlu0 %1676, %v983
      %v1678 = vpop.permute.xlu0 %1677
      %1680 = vset.pattern.permute.xlu0 2
      %1681 = vperm.xlu0 %1680, %v984
      %v1682 = vpop.permute.xlu0 %1681
      %1684 = vset.pattern.permute.xlu0 2
      %1685 = vperm.xlu0 %1684, %v985
      %v1686 = vpop.permute.xlu0 %1685
      %1688 = vset.pattern.permute.xlu0 2
      %1689 = vperm.xlu0 %1688, %v986
      %v1690 = vpop.permute.xlu0 %1689
      %1692 = vset.pattern.permute.xlu0 2
      %1693 = vperm.xlu0 %1692, %v987
      %v1694 = vpop.permute.xlu0 %1693
      %1696 = vset.pattern.permute.xlu0 2
      %1697 = vperm.xlu0 %1696, %v988
      %v1698 = vpop.permute.xlu0 %1697
      %1700 = vset.pattern.permute.xlu0 2
      %1701 = vperm.xlu0 %1700, %v989
      %v1702 = vpop.permute.xlu0 %1701
      %1704 = vset.pattern.permute.xlu0 2
      %1705 = vperm.xlu0 %1704, %v990
      %v1706 = vpop.permute.xlu0 %1705
      %1708 = vset.pattern.permute.xlu0 2
      %1709 = vperm.xlu0 %1708, %v991
      %v1710 = vpop.permute.xlu0 %1709
      %v1712 = vmul.f32 %v992, %v1650
      %v1713 = vmul.f32 %v993, %v1654
      %v1714 = vmul.f32 %v994, %v1658
      %v1715 = vmul.f32 %v995, %v1662
      %v1716 = vmul.f32 %v996, %v1666
      %v1717 = vmul.f32 %v997, %v1670
      %v1718 = vmul.f32 %v998, %v1674
      %v1719 = vmul.f32 %v999, %v1678
      %v1720 = vmul.f32 %v1000, %v1682
      %v1721 = vmul.f32 %v1001, %v1686
      %v1722 = vmul.f32 %v1002, %v1690
      %v1723 = vmul.f32 %v1003, %v1694
      %v1724 = vmul.f32 %v1004, %v1698
      %v1725 = vmul.f32 %v1005, %v1702
      %v1726 = vmul.f32 %v1006, %v1706
      %v1727 = vmul.f32 %v1007, %v1710
      %1744 = vrot.lane.b32.xlu0 %v1712, 7
      %v1745 = vpop.permute.xlu0 %1744
      %1746 = vrot.lane.b32.xlu0 %v1713, 7
      %v1747 = vpop.permute.xlu0 %1746
      %1748 = vrot.lane.b32.xlu0 %v1714, 7
      %v1749 = vpop.permute.xlu0 %1748
      %1750 = vrot.lane.b32.xlu0 %v1715, 7
      %v1751 = vpop.permute.xlu0 %1750
      %1752 = vrot.lane.b32.xlu0 %v1716, 7
      %v1753 = vpop.permute.xlu0 %1752
      %1754 = vrot.lane.b32.xlu0 %v1717, 7
      %v1755 = vpop.permute.xlu0 %1754
      %1756 = vrot.lane.b32.xlu0 %v1718, 7
      %v1757 = vpop.permute.xlu0 %1756
      %1758 = vrot.lane.b32.xlu0 %v1719, 7
      %v1759 = vpop.permute.xlu0 %1758
      %1760 = vrot.lane.b32.xlu0 %v1720, 7
      %v1761 = vpop.permute.xlu0 %1760
      %1762 = vrot.lane.b32.xlu0 %v1721, 7
      %v1763 = vpop.permute.xlu0 %1762
      %1764 = vrot.lane.b32.xlu0 %v1722, 7
      %v1765 = vpop.permute.xlu0 %1764
      %1766 = vrot.lane.b32.xlu0 %v1723, 7
      %v1767 = vpop.permute.xlu0 %1766
      %1768 = vrot.lane.b32.xlu0 %v1724, 7
      %v1769 = vpop.permute.xlu0 %1768
      %1770 = vrot.lane.b32.xlu0 %v1725, 7
      %v1771 = vpop.permute.xlu0 %1770
      %1772 = vrot.lane.b32.xlu0 %v1726, 7
      %v1773 = vpop.permute.xlu0 %1772
      %1774 = vrot.lane.b32.xlu0 %v1727, 7
      %v1775 = vpop.permute.xlu0 %1774
      %v1792 = vsub.f32 %v1632, %v1745
      %v1793 = vsub.f32 %v1633, %v1747
      %v1794 = vsub.f32 %v1634, %v1749
      %v1795 = vsub.f32 %v1635, %v1751
      %v1796 = vsub.f32 %v1636, %v1753
      %v1797 = vsub.f32 %v1637, %v1755
      %v1798 = vsub.f32 %v1638, %v1757
      %v1799 = vsub.f32 %v1639, %v1759
      %v1800 = vsub.f32 %v1640, %v1761
      %v1801 = vsub.f32 %v1641, %v1763
      %v1802 = vsub.f32 %v1642, %v1765
      %v1803 = vsub.f32 %v1643, %v1767
      %v1804 = vsub.f32 %v1644, %v1769
      %v1805 = vsub.f32 %v1645, %v1771
      %v1806 = vsub.f32 %v1646, %v1773
      %v1807 = vsub.f32 %v1647, %v1775
      %v1808 = vmul.f32 %v155, %v992
      %v1809 = vmul.f32 %v159, %v993
      %v1810 = vmul.f32 %v163, %v994
      %v1811 = vmul.f32 %v167, %v995
      %v1812 = vmul.f32 %v171, %v996
      %v1813 = vmul.f32 %v175, %v997
      %v1814 = vmul.f32 %v179, %v998
      %v1815 = vmul.f32 %v183, %v999
      %v1816 = vmul.f32 %v187, %v1000
      %v1817 = vmul.f32 %v191, %v1001
      %v1818 = vmul.f32 %v195, %v1002
      %v1819 = vmul.f32 %v199, %v1003
      %v1820 = vmul.f32 %v203, %v1004
      %v1821 = vmul.f32 %v207, %v1005
      %v1822 = vmul.f32 %v211, %v1006
      %v1823 = vmul.f32 %v215, %v1007
      %v1824 = vmul.f32 %v1808, %v1011
      %v1825 = vmul.f32 %v1809, %v1016
      %v1826 = vmul.f32 %v1810, %v1021
      %v1827 = vmul.f32 %v1811, %v1026
      %v1828 = vmul.f32 %v1812, %v1031
      %v1829 = vmul.f32 %v1813, %v1036
      %v1830 = vmul.f32 %v1814, %v1041
      %v1831 = vmul.f32 %v1815, %v1046
      %v1832 = vmul.f32 %v1816, %v1051
      %v1833 = vmul.f32 %v1817, %v1056
      %v1834 = vmul.f32 %v1818, %v1061
      %v1835 = vmul.f32 %v1819, %v1066
      %v1836 = vmul.f32 %v1820, %v1071
      %v1837 = vmul.f32 %v1821, %v1076
      %v1838 = vmul.f32 %v1822, %v1081
      %v1839 = vmul.f32 %v1823, %v1086
      %1856 = vrot.lane.b32.xlu0 %v1824, 7
      %v1857 = vpop.permute.xlu0 %1856
      %1858 = vrot.lane.b32.xlu0 %v1825, 7
      %v1859 = vpop.permute.xlu0 %1858
      %1860 = vrot.lane.b32.xlu0 %v1826, 7
      %v1861 = vpop.permute.xlu0 %1860
      %1862 = vrot.lane.b32.xlu0 %v1827, 7
      %v1863 = vpop.permute.xlu0 %1862
      %1864 = vrot.lane.b32.xlu0 %v1828, 7
      %v1865 = vpop.permute.xlu0 %1864
      %1866 = vrot.lane.b32.xlu0 %v1829, 7
      %v1867 = vpop.permute.xlu0 %1866
      %1868 = vrot.lane.b32.xlu0 %v1830, 7
      %v1869 = vpop.permute.xlu0 %1868
      %1870 = vrot.lane.b32.xlu0 %v1831, 7
      %v1871 = vpop.permute.xlu0 %1870
      %1872 = vrot.lane.b32.xlu0 %v1832, 7
      %v1873 = vpop.permute.xlu0 %1872
      %1874 = vrot.lane.b32.xlu0 %v1833, 7
      %v1875 = vpop.permute.xlu0 %1874
      %1876 = vrot.lane.b32.xlu0 %v1834, 7
      %v1877 = vpop.permute.xlu0 %1876
      %1878 = vrot.lane.b32.xlu0 %v1835, 7
      %v1879 = vpop.permute.xlu0 %1878
      %1880 = vrot.lane.b32.xlu0 %v1836, 7
      %v1881 = vpop.permute.xlu0 %1880
      %1882 = vrot.lane.b32.xlu0 %v1837, 7
      %v1883 = vpop.permute.xlu0 %1882
      %1884 = vrot.lane.b32.xlu0 %v1838, 7
      %v1885 = vpop.permute.xlu0 %1884
      %1886 = vrot.lane.b32.xlu0 %v1839, 7
      %v1887 = vpop.permute.xlu0 %1886
      %v1904 = vadd.f32 %v1792, %v1857
      %v1905 = vadd.f32 %v1793, %v1859
      %v1906 = vadd.f32 %v1794, %v1861
      %v1907 = vadd.f32 %v1795, %v1863
      %v1908 = vadd.f32 %v1796, %v1865
      %v1909 = vadd.f32 %v1797, %v1867
      %v1910 = vadd.f32 %v1798, %v1869
      %v1911 = vadd.f32 %v1799, %v1871
      %v1912 = vadd.f32 %v1800, %v1873
      %v1913 = vadd.f32 %v1801, %v1875
      %v1914 = vadd.f32 %v1802, %v1877
      %v1915 = vadd.f32 %v1803, %v1879
      %v1916 = vadd.f32 %v1804, %v1881
      %v1917 = vadd.f32 %v1805, %v1883
      %v1918 = vadd.f32 %v1806, %v1885
      %v1919 = vadd.f32 %v1807, %v1887
      %v1920 = vmul.f32 %v236, %v976
      %v1921 = vmul.f32 %v240, %v977
      %v1922 = vmul.f32 %v244, %v978
      %v1923 = vmul.f32 %v248, %v979
      %v1924 = vmul.f32 %v252, %v980
      %v1925 = vmul.f32 %v256, %v981
      %v1926 = vmul.f32 %v260, %v982
      %v1927 = vmul.f32 %v264, %v983
      %v1928 = vmul.f32 %v268, %v984
      %v1929 = vmul.f32 %v272, %v985
      %v1930 = vmul.f32 %v276, %v986
      %v1931 = vmul.f32 %v280, %v987
      %v1932 = vmul.f32 %v284, %v988
      %v1933 = vmul.f32 %v288, %v989
      %v1934 = vmul.f32 %v292, %v990
      %v1935 = vmul.f32 %v296, %v991
      %1952 = vrot.lane.b32.xlu0 %v1920, 9
      %v1953 = vpop.permute.xlu0 %1952
      %1954 = vrot.lane.b32.xlu0 %v1921, 9
      %v1955 = vpop.permute.xlu0 %1954
      %1956 = vrot.lane.b32.xlu0 %v1922, 9
      %v1957 = vpop.permute.xlu0 %1956
      %1958 = vrot.lane.b32.xlu0 %v1923, 9
      %v1959 = vpop.permute.xlu0 %1958
      %1960 = vrot.lane.b32.xlu0 %v1924, 9
      %v1961 = vpop.permute.xlu0 %1960
      %1962 = vrot.lane.b32.xlu0 %v1925, 9
      %v1963 = vpop.permute.xlu0 %1962
      %1964 = vrot.lane.b32.xlu0 %v1926, 9
      %v1965 = vpop.permute.xlu0 %1964
      %1966 = vrot.lane.b32.xlu0 %v1927, 9
      %v1967 = vpop.permute.xlu0 %1966
      %1968 = vrot.lane.b32.xlu0 %v1928, 9
      %v1969 = vpop.permute.xlu0 %1968
      %1970 = vrot.lane.b32.xlu0 %v1929, 9
      %v1971 = vpop.permute.xlu0 %1970
      %1972 = vrot.lane.b32.xlu0 %v1930, 9
      %v1973 = vpop.permute.xlu0 %1972
      %1974 = vrot.lane.b32.xlu0 %v1931, 9
      %v1975 = vpop.permute.xlu0 %1974
      %1976 = vrot.lane.b32.xlu0 %v1932, 9
      %v1977 = vpop.permute.xlu0 %1976
      %1978 = vrot.lane.b32.xlu0 %v1933, 9
      %v1979 = vpop.permute.xlu0 %1978
      %1980 = vrot.lane.b32.xlu0 %v1934, 9
      %v1981 = vpop.permute.xlu0 %1980
      %1982 = vrot.lane.b32.xlu0 %v1935, 9
      %v1983 = vpop.permute.xlu0 %1982
      %v2000 = vsub.f32 %v976, %v1953
      %v2001 = vsub.f32 %v977, %v1955
      %v2002 = vsub.f32 %v978, %v1957
      %v2003 = vsub.f32 %v979, %v1959
      %v2004 = vsub.f32 %v980, %v1961
      %v2005 = vsub.f32 %v981, %v1963
      %v2006 = vsub.f32 %v982, %v1965
      %v2007 = vsub.f32 %v983, %v1967
      %v2008 = vsub.f32 %v984, %v1969
      %v2009 = vsub.f32 %v985, %v1971
      %v2010 = vsub.f32 %v986, %v1973
      %v2011 = vsub.f32 %v987, %v1975
      %v2012 = vsub.f32 %v988, %v1977
      %v2013 = vsub.f32 %v989, %v1979
      %v2014 = vsub.f32 %v990, %v1981
      %v2015 = vsub.f32 %v991, %v1983
      %2016 = vset.pattern.permute.xlu0 3
      %2017 = vperm.xlu0 %2016, %v976
      %v2018 = vpop.permute.xlu0 %2017
      %2020 = vset.pattern.permute.xlu0 3
      %2021 = vperm.xlu0 %2020, %v977
      %v2022 = vpop.permute.xlu0 %2021
      %2024 = vset.pattern.permute.xlu0 3
      %2025 = vperm.xlu0 %2024, %v978
      %v2026 = vpop.permute.xlu0 %2025
      %2028 = vset.pattern.permute.xlu0 3
      %2029 = vperm.xlu0 %2028, %v979
      %v2030 = vpop.permute.xlu0 %2029
      %2032 = vset.pattern.permute.xlu0 3
      %2033 = vperm.xlu0 %2032, %v980
      %v2034 = vpop.permute.xlu0 %2033
      %2036 = vset.pattern.permute.xlu0 3
      %2037 = vperm.xlu0 %2036, %v981
      %v2038 = vpop.permute.xlu0 %2037
      %2040 = vset.pattern.permute.xlu0 3
      %2041 = vperm.xlu0 %2040, %v982
      %v2042 = vpop.permute.xlu0 %2041
      %2044 = vset.pattern.permute.xlu0 3
      %2045 = vperm.xlu0 %2044, %v983
      %v2046 = vpop.permute.xlu0 %2045
      %2048 = vset.pattern.permute.xlu0 3
      %2049 = vperm.xlu0 %2048, %v984
      %v2050 = vpop.permute.xlu0 %2049
      %2052 = vset.pattern.permute.xlu0 3
      %2053 = vperm.xlu0 %2052, %v985
      %v2054 = vpop.permute.xlu0 %2053
      %2056 = vset.pattern.permute.xlu0 3
      %2057 = vperm.xlu0 %2056, %v986
      %v2058 = vpop.permute.xlu0 %2057
      %2060 = vset.pattern.permute.xlu0 3
      %2061 = vperm.xlu0 %2060, %v987
      %v2062 = vpop.permute.xlu0 %2061
      %2064 = vset.pattern.permute.xlu0 3
      %2065 = vperm.xlu0 %2064, %v988
      %v2066 = vpop.permute.xlu0 %2065
      %2068 = vset.pattern.permute.xlu0 3
      %2069 = vperm.xlu0 %2068, %v989
      %v2070 = vpop.permute.xlu0 %2069
      %2072 = vset.pattern.permute.xlu0 3
      %2073 = vperm.xlu0 %2072, %v990
      %v2074 = vpop.permute.xlu0 %2073
      %2076 = vset.pattern.permute.xlu0 3
      %2077 = vperm.xlu0 %2076, %v991
      %v2078 = vpop.permute.xlu0 %2077
      %v2080 = vmul.f32 %v992, %v2018
      %v2081 = vmul.f32 %v993, %v2022
      %v2082 = vmul.f32 %v994, %v2026
      %v2083 = vmul.f32 %v995, %v2030
      %v2084 = vmul.f32 %v996, %v2034
      %v2085 = vmul.f32 %v997, %v2038
      %v2086 = vmul.f32 %v998, %v2042
      %v2087 = vmul.f32 %v999, %v2046
      %v2088 = vmul.f32 %v1000, %v2050
      %v2089 = vmul.f32 %v1001, %v2054
      %v2090 = vmul.f32 %v1002, %v2058
      %v2091 = vmul.f32 %v1003, %v2062
      %v2092 = vmul.f32 %v1004, %v2066
      %v2093 = vmul.f32 %v1005, %v2070
      %v2094 = vmul.f32 %v1006, %v2074
      %v2095 = vmul.f32 %v1007, %v2078
      %2112 = vrot.lane.b32.xlu0 %v2080, 10
      %v2113 = vpop.permute.xlu0 %2112
      %2114 = vrot.lane.b32.xlu0 %v2081, 10
      %v2115 = vpop.permute.xlu0 %2114
      %2116 = vrot.lane.b32.xlu0 %v2082, 10
      %v2117 = vpop.permute.xlu0 %2116
      %2118 = vrot.lane.b32.xlu0 %v2083, 10
      %v2119 = vpop.permute.xlu0 %2118
      %2120 = vrot.lane.b32.xlu0 %v2084, 10
      %v2121 = vpop.permute.xlu0 %2120
      %2122 = vrot.lane.b32.xlu0 %v2085, 10
      %v2123 = vpop.permute.xlu0 %2122
      %2124 = vrot.lane.b32.xlu0 %v2086, 10
      %v2125 = vpop.permute.xlu0 %2124
      %2126 = vrot.lane.b32.xlu0 %v2087, 10
      %v2127 = vpop.permute.xlu0 %2126
      %2128 = vrot.lane.b32.xlu0 %v2088, 10
      %v2129 = vpop.permute.xlu0 %2128
      %2130 = vrot.lane.b32.xlu0 %v2089, 10
      %v2131 = vpop.permute.xlu0 %2130
      %2132 = vrot.lane.b32.xlu0 %v2090, 10
      %v2133 = vpop.permute.xlu0 %2132
      %2134 = vrot.lane.b32.xlu0 %v2091, 10
      %v2135 = vpop.permute.xlu0 %2134
      %2136 = vrot.lane.b32.xlu0 %v2092, 10
      %v2137 = vpop.permute.xlu0 %2136
      %2138 = vrot.lane.b32.xlu0 %v2093, 10
      %v2139 = vpop.permute.xlu0 %2138
      %2140 = vrot.lane.b32.xlu0 %v2094, 10
      %v2141 = vpop.permute.xlu0 %2140
      %2142 = vrot.lane.b32.xlu0 %v2095, 10
      %v2143 = vpop.permute.xlu0 %2142
      %v2160 = vsub.f32 %v2000, %v2113
      %v2161 = vsub.f32 %v2001, %v2115
      %v2162 = vsub.f32 %v2002, %v2117
      %v2163 = vsub.f32 %v2003, %v2119
      %v2164 = vsub.f32 %v2004, %v2121
      %v2165 = vsub.f32 %v2005, %v2123
      %v2166 = vsub.f32 %v2006, %v2125
      %v2167 = vsub.f32 %v2007, %v2127
      %v2168 = vsub.f32 %v2008, %v2129
      %v2169 = vsub.f32 %v2009, %v2131
      %v2170 = vsub.f32 %v2010, %v2133
      %v2171 = vsub.f32 %v2011, %v2135
      %v2172 = vsub.f32 %v2012, %v2137
      %v2173 = vsub.f32 %v2013, %v2139
      %v2174 = vsub.f32 %v2014, %v2141
      %v2175 = vsub.f32 %v2015, %v2143
      %v2176 = vmul.f32 %v236, %v992
      %v2177 = vmul.f32 %v240, %v993
      %v2178 = vmul.f32 %v244, %v994
      %v2179 = vmul.f32 %v248, %v995
      %v2180 = vmul.f32 %v252, %v996
      %v2181 = vmul.f32 %v256, %v997
      %v2182 = vmul.f32 %v260, %v998
      %v2183 = vmul.f32 %v264, %v999
      %v2184 = vmul.f32 %v268, %v1000
      %v2185 = vmul.f32 %v272, %v1001
      %v2186 = vmul.f32 %v276, %v1002
      %v2187 = vmul.f32 %v280, %v1003
      %v2188 = vmul.f32 %v284, %v1004
      %v2189 = vmul.f32 %v288, %v1005
      %v2190 = vmul.f32 %v292, %v1006
      %v2191 = vmul.f32 %v296, %v1007
      %v2192 = vmul.f32 %v2176, %v1011
      %v2193 = vmul.f32 %v2177, %v1016
      %v2194 = vmul.f32 %v2178, %v1021
      %v2195 = vmul.f32 %v2179, %v1026
      %v2196 = vmul.f32 %v2180, %v1031
      %v2197 = vmul.f32 %v2181, %v1036
      %v2198 = vmul.f32 %v2182, %v1041
      %v2199 = vmul.f32 %v2183, %v1046
      %v2200 = vmul.f32 %v2184, %v1051
      %v2201 = vmul.f32 %v2185, %v1056
      %v2202 = vmul.f32 %v2186, %v1061
      %v2203 = vmul.f32 %v2187, %v1066
      %v2204 = vmul.f32 %v2188, %v1071
      %v2205 = vmul.f32 %v2189, %v1076
      %v2206 = vmul.f32 %v2190, %v1081
      %v2207 = vmul.f32 %v2191, %v1086
      %2224 = vrot.lane.b32.xlu0 %v2192, 10
      %v2225 = vpop.permute.xlu0 %2224
      %2226 = vrot.lane.b32.xlu0 %v2193, 10
      %v2227 = vpop.permute.xlu0 %2226
      %2228 = vrot.lane.b32.xlu0 %v2194, 10
      %v2229 = vpop.permute.xlu0 %2228
      %2230 = vrot.lane.b32.xlu0 %v2195, 10
      %v2231 = vpop.permute.xlu0 %2230
      %2232 = vrot.lane.b32.xlu0 %v2196, 10
      %v2233 = vpop.permute.xlu0 %2232
      %2234 = vrot.lane.b32.xlu0 %v2197, 10
      %v2235 = vpop.permute.xlu0 %2234
      %2236 = vrot.lane.b32.xlu0 %v2198, 10
      %v2237 = vpop.permute.xlu0 %2236
      %2238 = vrot.lane.b32.xlu0 %v2199, 10
      %v2239 = vpop.permute.xlu0 %2238
      %2240 = vrot.lane.b32.xlu0 %v2200, 10
      %v2241 = vpop.permute.xlu0 %2240
      %2242 = vrot.lane.b32.xlu0 %v2201, 10
      %v2243 = vpop.permute.xlu0 %2242
      %2244 = vrot.lane.b32.xlu0 %v2202, 10
      %v2245 = vpop.permute.xlu0 %2244
      %2246 = vrot.lane.b32.xlu0 %v2203, 10
      %v2247 = vpop.permute.xlu0 %2246
      %2248 = vrot.lane.b32.xlu0 %v2204, 10
      %v2249 = vpop.permute.xlu0 %2248
      %2250 = vrot.lane.b32.xlu0 %v2205, 10
      %v2251 = vpop.permute.xlu0 %2250
      %2252 = vrot.lane.b32.xlu0 %v2206, 10
      %v2253 = vpop.permute.xlu0 %2252
      %2254 = vrot.lane.b32.xlu0 %v2207, 10
      %v2255 = vpop.permute.xlu0 %2254
      %v2272 = vadd.f32 %v2160, %v2225
      %v2273 = vadd.f32 %v2161, %v2227
      %v2274 = vadd.f32 %v2162, %v2229
      %v2275 = vadd.f32 %v2163, %v2231
      %v2276 = vadd.f32 %v2164, %v2233
      %v2277 = vadd.f32 %v2165, %v2235
      %v2278 = vadd.f32 %v2166, %v2237
      %v2279 = vadd.f32 %v2167, %v2239
      %v2280 = vadd.f32 %v2168, %v2241
      %v2281 = vadd.f32 %v2169, %v2243
      %v2282 = vadd.f32 %v2170, %v2245
      %v2283 = vadd.f32 %v2171, %v2247
      %v2284 = vadd.f32 %v2172, %v2249
      %v2285 = vadd.f32 %v2173, %v2251
      %v2286 = vadd.f32 %v2174, %v2253
      %v2287 = vadd.f32 %v2175, %v2255
      %2288 = vrot.lane.b32.xlu0 %v976, 115
      %v2289 = vpop.permute.xlu0 %2288
      %2290 = vrot.lane.b32.xlu0 %v977, 115
      %v2291 = vpop.permute.xlu0 %2290
      %2292 = vrot.lane.b32.xlu0 %v978, 115
      %v2293 = vpop.permute.xlu0 %2292
      %2294 = vrot.lane.b32.xlu0 %v979, 115
      %v2295 = vpop.permute.xlu0 %2294
      %2296 = vrot.lane.b32.xlu0 %v980, 115
      %v2297 = vpop.permute.xlu0 %2296
      %2298 = vrot.lane.b32.xlu0 %v981, 115
      %v2299 = vpop.permute.xlu0 %2298
      %2300 = vrot.lane.b32.xlu0 %v982, 115
      %v2301 = vpop.permute.xlu0 %2300
      %2302 = vrot.lane.b32.xlu0 %v983, 115
      %v2303 = vpop.permute.xlu0 %2302
      %2304 = vrot.lane.b32.xlu0 %v984, 115
      %v2305 = vpop.permute.xlu0 %2304
      %2306 = vrot.lane.b32.xlu0 %v985, 115
      %v2307 = vpop.permute.xlu0 %2306
      %2308 = vrot.lane.b32.xlu0 %v986, 115
      %v2309 = vpop.permute.xlu0 %2308
      %2310 = vrot.lane.b32.xlu0 %v987, 115
      %v2311 = vpop.permute.xlu0 %2310
      %2312 = vrot.lane.b32.xlu0 %v988, 115
      %v2313 = vpop.permute.xlu0 %2312
      %2314 = vrot.lane.b32.xlu0 %v989, 115
      %v2315 = vpop.permute.xlu0 %2314
      %2316 = vrot.lane.b32.xlu0 %v990, 115
      %v2317 = vpop.permute.xlu0 %2316
      %2318 = vrot.lane.b32.xlu0 %v991, 115
      %v2319 = vpop.permute.xlu0 %2318
      %vm2336 = vcmask 7168
      %v2337 = vsel %vm2336, %v2289, %v1168
      %v2338 = vsel %vm2336, %v2291, %v1169
      %v2339 = vsel %vm2336, %v2293, %v1170
      %v2340 = vsel %vm2336, %v2295, %v1171
      %v2341 = vsel %vm2336, %v2297, %v1172
      %v2342 = vsel %vm2336, %v2299, %v1173
      %v2343 = vsel %vm2336, %v2301, %v1174
      %v2344 = vsel %vm2336, %v2303, %v1175
      %v2345 = vsel %vm2336, %v2305, %v1176
      %v2346 = vsel %vm2336, %v2307, %v1177
      %v2347 = vsel %vm2336, %v2309, %v1178
      %v2348 = vsel %vm2336, %v2311, %v1179
      %v2349 = vsel %vm2336, %v2313, %v1180
      %v2350 = vsel %vm2336, %v2315, %v1181
      %v2351 = vsel %vm2336, %v2317, %v1182
      %v2352 = vsel %vm2336, %v2319, %v1183
      %vm2353 = vcmask 31744
      %v2354 = vsel %vm2353, %v2337, %v1536
      %v2355 = vsel %vm2353, %v2338, %v1537
      %v2356 = vsel %vm2353, %v2339, %v1538
      %v2357 = vsel %vm2353, %v2340, %v1539
      %v2358 = vsel %vm2353, %v2341, %v1540
      %v2359 = vsel %vm2353, %v2342, %v1541
      %v2360 = vsel %vm2353, %v2343, %v1542
      %v2361 = vsel %vm2353, %v2344, %v1543
      %v2362 = vsel %vm2353, %v2345, %v1544
      %v2363 = vsel %vm2353, %v2346, %v1545
      %v2364 = vsel %vm2353, %v2347, %v1546
      %v2365 = vsel %vm2353, %v2348, %v1547
      %v2366 = vsel %vm2353, %v2349, %v1548
      %v2367 = vsel %vm2353, %v2350, %v1549
      %v2368 = vsel %vm2353, %v2351, %v1550
      %v2369 = vsel %vm2353, %v2352, %v1551
      %vm2370 = vcmask 56320
      %v2371 = vsel %vm2370, %v2354, %v1904
      %v2372 = vsel %vm2370, %v2355, %v1905
      %v2373 = vsel %vm2370, %v2356, %v1906
      %v2374 = vsel %vm2370, %v2357, %v1907
      %v2375 = vsel %vm2370, %v2358, %v1908
      %v2376 = vsel %vm2370, %v2359, %v1909
      %v2377 = vsel %vm2370, %v2360, %v1910
      %v2378 = vsel %vm2370, %v2361, %v1911
      %v2379 = vsel %vm2370, %v2362, %v1912
      %v2380 = vsel %vm2370, %v2363, %v1913
      %v2381 = vsel %vm2370, %v2364, %v1914
      %v2382 = vsel %vm2370, %v2365, %v1915
      %v2383 = vsel %vm2370, %v2366, %v1916
      %v2384 = vsel %vm2370, %v2367, %v1917
      %v2385 = vsel %vm2370, %v2368, %v1918
      %v2386 = vsel %vm2370, %v2369, %v1919
      %vm2387 = vcmask 80896
      %v2388 = vsel %vm2387, %v2371, %v2272
      %v2389 = vsel %vm2387, %v2372, %v2273
      %v2390 = vsel %vm2387, %v2373, %v2274
      %v2391 = vsel %vm2387, %v2374, %v2275
      %v2392 = vsel %vm2387, %v2375, %v2276
      %v2393 = vsel %vm2387, %v2376, %v2277
      %v2394 = vsel %vm2387, %v2377, %v2278
      %v2395 = vsel %vm2387, %v2378, %v2279
      %v2396 = vsel %vm2387, %v2379, %v2280
      %v2397 = vsel %vm2387, %v2380, %v2281
      %v2398 = vsel %vm2387, %v2381, %v2282
      %v2399 = vsel %vm2387, %v2382, %v2283
      %v2400 = vsel %vm2387, %v2383, %v2284
      %v2401 = vsel %vm2387, %v2384, %v2285
      %v2402 = vsel %vm2387, %v2385, %v2286
      %v2403 = vsel %vm2387, %v2386, %v2287
      %vm2404 = vcmask 105472
      %v2405 = vsel %vm2404, %v2388, 0.0
      %v2406 = vsel %vm2404, %v2389, 0.0
      %v2407 = vsel %vm2404, %v2390, 0.0
      %v2408 = vsel %vm2404, %v2391, 0.0
      %v2409 = vsel %vm2404, %v2392, 0.0
      %v2410 = vsel %vm2404, %v2393, 0.0
      %v2411 = vsel %vm2404, %v2394, 0.0
      %v2412 = vsel %vm2404, %v2395, 0.0
      %v2413 = vsel %vm2404, %v2396, 0.0
      %v2414 = vsel %vm2404, %v2397, 0.0
      %v2415 = vsel %vm2404, %v2398, 0.0
      %v2416 = vsel %vm2404, %v2399, 0.0
      %v2417 = vsel %vm2404, %v2400, 0.0
      %v2418 = vsel %vm2404, %v2401, 0.0
      %v2419 = vsel %vm2404, %v2402, 0.0
      %v2420 = vsel %vm2404, %v2403, 0.0
      %2421 = vst [vmem:[#allocation3] sm:$0xff] %v2405
      %2422 = vst [vmem:[#allocation3 + $0x8] sm:$0xff] %v2406
      %2423 = vst [vmem:[#allocation3 + $0x10] sm:$0xff] %v2407
      %2424 = vst [vmem:[#allocation3 + $0x18] sm:$0xff] %v2408
      %2425 = vst [vmem:[#allocation3 + $0x20] sm:$0xff] %v2409
      %2426 = vst [vmem:[#allocation3 + $0x28] sm:$0xff] %v2410
      %2427 = vst [vmem:[#allocation3 + $0x30] sm:$0xff] %v2411
      %2428 = vst [vmem:[#allocation3 + $0x38] sm:$0xff] %v2412
      %2429 = vst [vmem:[#allocation3 + $0x40] sm:$0xff] %v2413
      %2430 = vst [vmem:[#allocation3 + $0x48] sm:$0xff] %v2414
      %2431 = vst [vmem:[#allocation3 + $0x50] sm:$0xff] %v2415
      %2432 = vst [vmem:[#allocation3 + $0x58] sm:$0xff] %v2416
      %2433 = vst [vmem:[#allocation3 + $0x60] sm:$0xff] %v2417
      %2434 = vst [vmem:[#allocation3 + $0x68] sm:$0xff] %v2418
      %2435 = vst [vmem:[#allocation3 + $0x70] sm:$0xff] %v2419
      %2436 = vst [vmem:[#allocation3 + $0x78] sm:$0xff] %v2420
    $region21: #{tpu_custom_call.1} parent=1 // pred_fallthru
      _
    // Predicated region
    $region22: #{tpu_custom_call.1} parent=1 // pred_check
      _
    $region23: #{tpu_custom_call.1} parent=1 // pred_check_branch
      %2438 = sbr.rel (0) target = $region25
    $region24: #{tpu_custom_call.1} parent=1 // pred_region
      %2440 = vsyncadd [#allocation4], 0
      %s2441 = sshll.u32 [#allocation3], 4
      %s2442 = int_to_ptr.vmem [resolvable:$true] %s2441
      %s2443 = sshll.u32 %s3, 4
      %s2444 = int_to_ptr.hbm [resolvable:$true] %s2443
      %2449 = dma.vmem_to_hbm [thread:$0]  %s2442, 2048, %s2444, [#allocation4], 128, 128, 8
    $region25: #{tpu_custom_call.1} parent=1 // pred_fallthru
      _
    // Predicated region
    $region26: #{tpu_custom_call.1} parent=1 // pred_check
      _
    $region27: #{tpu_custom_call.1} parent=1 // pred_check_branch
      %2451 = sbr.rel (0) target = $region29
    $region28: #{tpu_custom_call.1} parent=1 // pred_region
      %2453 = dma.done [#allocation4], 2048
    $region29: #{tpu_custom_call.1} parent=1 // pred_fallthru
      _
    %2454 = vsyncpa [#allocation4], 1

</llo_original>
